<compile_context>
chip_gen: v7x
topology: tpu7x:2x2x1
jax: 0.10.0
libtpu: 0.0.40
codegen_flags: <defaults>
</compile_context>

<pallas_src>
import functools
import math

import jax
import jax.numpy as jnp
from jax import lax
from jax.experimental import pallas as pl
from jax.experimental.pallas import tpu as pltpu


def _round_up(x, m):
    return (x + m - 1) // m * m


# ----------------------------- Pallas kernels ------------------------------ #

def _conv3x3s2_kernel(x_ref, w_ref, b_ref, o_ref, *, tr, wo_p, cin):
    """Fused 3x3 / stride-2 conv on 2x2 stride-phase planes.

    x_ref: (4, 1, Hq, Wq, Cin)  phase planes of one padded image (resident).
    w_ref: (9, Cin, tn)         per-tap GEMM weights (resident per cout tile).
    b_ref: (1, tn)              f32 bias.
    o_ref: (1, tr*wo_p, tn)     flat, lane-dense output tile.
    """
    r = pl.program_id(2)
    row0 = r * tr
    m = tr * wo_p
    tn = o_ref.shape[-1]

    acc = jnp.zeros((m, tn), jnp.float32)
    for kh in range(3):
        ph, dh = kh % 2, kh // 2           # padded row 2*(i+dh)+ph == 2*i+kh
        for kw in range(3):
            pw, dw = kw % 2, kw // 2
            tap = x_ref[2 * ph + pw, 0,
                        pl.ds(row0 + dh, tr), pl.ds(dw, wo_p), :]
            acc = acc + jnp.dot(tap.reshape(m, cin), w_ref[3 * kh + kw],
                                preferred_element_type=jnp.float32)
    o_ref[0] = (acc + b_ref[...].astype(jnp.float32)).astype(o_ref.dtype)


def _avgpool_kernel(x_ref, o_ref):
    """2x2 / stride-2 average pool on (tr, 2, Wo, 2C) input blocks."""
    x = x_ref[...].astype(jnp.float32)     # (tr, 2, Wo, 2C)
    s = x[:, 0] + x[:, 1]                  # vertical tap sum -> (tr, Wo, 2C)
    c = o_ref.shape[-1]
    o_ref[...] = ((s[:, :, :c] + s[:, :, c:]) * 0.25).astype(o_ref.dtype)


# ------------------------------ Module wrapper ----------------------------- #

class Downsample:
    """JAX/Pallas port of the PyTorch Downsample module (dims=2)."""

    def __init__(self, channels, use_conv, dims=2, out_channels=None, *,
                 key, compute_dtype=None):
        assert dims == 2, "Pallas port implements the dims=2 case."
        self.channels = channels
        self.out_channels = out_channels or channels
        self.use_conv = use_conv
        self.dims = dims
        self.compute_dtype = jnp.dtype(compute_dtype or jnp.float32)
        if use_conv:
            # Deterministic init mimicking nn.Conv2d defaults.
            fan_in = channels * 3 * 3
            bound = 1.0 / math.sqrt(fan_in)
            k_w, k_b = jax.random.split(key)
            self.weight = jax.random.uniform(              # PyTorch OIHW layout
                k_w, (self.out_channels, channels, 3, 3), jnp.float32, -bound, bound)
            self.bias = jax.random.uniform(
                k_b, (self.out_channels,), jnp.float32, -bound, bound)

            # Tap-GEMM weights packed ONCE: (kh*3+kw, cin, cout_padded), cout
            # padded to a 128 multiple so output stores are lane-dense; stored
            # in the compute dtype so no per-forward weight cast pass.
            self.n_pad = _round_up(self.out_channels, 128)
            w_taps = jnp.transpose(self.weight, (2, 3, 1, 0)).reshape(
                9, channels, self.out_channels)
            self.w_taps = jnp.pad(
                w_taps, ((0, 0), (0, 0), (0, self.n_pad - self.out_channels))
            ).astype(self.compute_dtype)
            self.b_gemm = jnp.pad(
                self.bias, (0, self.n_pad - self.out_channels)
            ).reshape(1, self.n_pad).astype(jnp.float32)
        else:
            assert self.channels == self.out_channels
            self.weight = None
            self.bias = None

    # -------- conv path: fused 3x3 / stride-2 / pad-1 tap GEMM -------------- #
    def _conv_forward(self, x_nchw):
        B, C, H, W = x_nchw.shape
        Cout = self.out_channels
        Npad = self.n_pad
        cdt = self.compute_dtype
        csize = cdt.itemsize
        osize = jnp.dtype(x_nchw.dtype).itemsize

        Ho = (H - 1) // 2 + 1                    # = (H + 2 - 3)//2 + 1
        Wo = (W - 1) // 2 + 1

        # --- tiling -------------------------------------------------------- #
        Wo_p = _round_up(Wo, 8)                  # 8-aligned so the flat-row merge is free
        tr = max(1, min(Ho, 1024 // Wo_p))       # ~1024 flat rows per tile
        Ho_p = _round_up(Ho, tr)
        n_r = Ho_p // tr
        tm = tr * Wo_p
        Hq, Wq = Ho_p + 1, Wo_p + 1              # phase planes carry the +1 halo row/col

        tn = 128
        for cand in (Npad, 512, 256, 128):       # prefer >=256 (2x256^2 MXU), bound VMEM
            if (Npad % cand == 0 and cand <= 1024
                    and 9 * C * cand * csize <= (8 << 20)
                    and tm * cand * 4 <= (6 << 20)):
                tn = cand
                break

        # --- single wrapper reorg: NCHW -> padded NHWC -> 2x2 phase planes -- #
        # P[2*ph+pw, b, i, j, c] = x_pad[b, 2*i+ph, 2*j+pw, c]
        x_nhwc = jnp.transpose(x_nchw, (0, 2, 3, 1)).astype(cdt)
        x_pad = jnp.pad(x_nhwc, ((0, 0), (1, 2 * Hq - 1 - H),
                                 (1, 2 * Wq - 1 - W), (0, 0)))
        x_ph = x_pad.reshape(B, Hq, 2, Wq, 2, C).transpose(
            2, 4, 0, 1, 3, 5).reshape(4, B, Hq, Wq, C)

        mi = Ho_p * Wo_p
        grid = (B, Npad // tn, n_r)

        vmem_need = (2 * 4 * Hq * Wq * C * csize      # resident phase planes (x2 buf)
                     + 2 * 9 * C * tn * csize         # tap weights
                     + 2 * tm * tn * osize            # output tile
                     + tm * tn * 4                    # f32 accumulator
                     + 2 * tm * C * csize             # tap staging
                     + (1 << 20))
        vmem_limit = int(min(max(vmem_need, 32 << 20), 48 << 20))  # safe on v5e/v6e/v7x

        cost = pl.CostEstimate(
            flops=2 * B * mi * 9 * C * Npad,
            transcendentals=0,
            bytes_accessed=int(4 * B * Hq * Wq * C * csize
                               + 9 * C * Npad * csize + B * mi * Npad * osize))

        kernel = functools.partial(_conv3x3s2_kernel, tr=tr, wo_p=Wo_p, cin=C)

        out_flat = pl.pallas_call(
            kernel,
            out_shape=jax.ShapeDtypeStruct((B, mi, Npad), x_nchw.dtype),
            grid=grid,
            in_specs=[
                # whole-image phase planes: index depends only on b -> stays resident
                pl.BlockSpec((4, 1, Hq, Wq, C), lambda b, j, r: (0, b, 0, 0, 0)),
                # tap weights / bias: index depends only on j -> resident across rows
                pl.BlockSpec((9, C, tn), lambda b, j, r: (0, 0, j)),
                pl.BlockSpec((1, tn), lambda b, j, r: (0, j)),
            ],
            out_specs=pl.BlockSpec((1, tm, tn), lambda b, j, r: (b, r, j)),
            compiler_params=pltpu.CompilerParams(
                dimension_semantics=("parallel", "parallel", "parallel"),
                vmem_limit_bytes=vmem_limit),
            cost_estimate=cost,
        )(x_ph, self.w_taps, self.b_gemm)

        out = out_flat.reshape(B, Ho_p, Wo_p, Npad)[:, :Ho, :Wo, :Cout]
        return jnp.transpose(out, (0, 3, 1, 2))       # back to NCHW

    # -------- avg-pool path: 2x2 / stride 2 ---------------------------------- #
    def _pool_forward(self, x_nchw):
        B, C, H, W = x_nchw.shape
        Ho, Wo = H // 2, W // 2                       # PyTorch AvgPool2d floors odd dims
        x_nhwc = jnp.transpose(x_nchw, (0, 2, 3, 1))[:, :2 * Ho, :2 * Wo, :]

        # Free reshape: (B, 2Ho, 2Wo, C) -> (B*Ho, 2, Wo, 2C): minor block dims
        # (Wo, 2C) are dense in (sublane, lane); no 9x/4x tap stack in HBM.
        R = B * Ho
        x_r = x_nhwc.reshape(R, 2, Wo, 2 * C)

        itemsize = jnp.dtype(x_nchw.dtype).itemsize
        row_bytes = max(4 * Wo * C * itemsize, 1)
        tr = max(1, min(R, (12 << 20) // row_bytes))  # ~12 MiB input block
        Rp = _round_up(R, tr)
        if Rp != R:                                   # padded tail instead of tr=1 fallback
            x_r = jnp.pad(x_r, ((0, Rp - R), (0, 0), (0, 0), (0, 0)))

        vmem_limit = int(min(max(5 * tr * row_bytes, 16 << 20), 48 << 20))

        out = pl.pallas_call(
            _avgpool_kernel,
            out_shape=jax.ShapeDtypeStruct((Rp, Wo, C), x_nchw.dtype),
            grid=(Rp // tr,),
            in_specs=[pl.BlockSpec((tr, 2, Wo, 2 * C), lambda i: (i, 0, 0, 0))],
            out_specs=pl.BlockSpec((tr, Wo, C), lambda i: (i, 0, 0)),
            compiler_params=pltpu.CompilerParams(
                dimension_semantics=("parallel",),
                vmem_limit_bytes=vmem_limit),
        )(x_r)

        out = out[:R].reshape(B, Ho, Wo, C)
        return jnp.transpose(out, (0, 3, 1, 2))       # back to NCHW

    def __call__(self, x_nchw):
        assert x_nchw.shape[1] == self.channels
        if self.use_conv:
            return self._conv_forward(x_nchw)
        return self._pool_forward(x_nchw)


# ------------------------------- references -------------------------------- #

def _conv_ref(x, w, b):
    y = lax.conv_general_dilated(
        x, w, window_strides=(2, 2), padding=((1, 1), (1, 1)),
        dimension_numbers=("NCHW", "OIHW", "NCHW"))
    return y + b.reshape(1, -1, 1, 1)


def _pool_ref(x):
    B, C, H, W = x.shape
    return x.reshape(B, C, H // 2, 2, W // 2, 2).mean(axis=(3, 5))


# ---------------------------------- main ----------------------------------- #

if __name__ == "__main__":
    key = jax.random.PRNGKey(0)
    k_x, k_params = jax.random.split(key)

    B, C, H, W = 2, 4, 16, 16
    x = jax.random.normal(k_x, (B, C, H, W), dtype=jnp.float32)

    # use_conv=True, f32 operands (bit-faithful to the PyTorch module).
    ds_conv = Downsample(C, use_conv=True, dims=2, out_channels=C, key=k_params)
    y_conv = jax.block_until_ready(ds_conv(x))
    y_ref = _conv_ref(x, ds_conv.weight, ds_conv.bias)
    assert y_conv.shape == (B, C, H // 2, W // 2), y_conv.shape
    assert jnp.allclose(y_conv, y_ref, atol=1e-4, rtol=1e-4), \
        float(jnp.max(jnp.abs(y_conv - y_ref)))

    # use_conv=True, bf16 operands on the MXU (the perf-recommended path).
    # Reference uses bf16-rounded operands, so only accumulation order differs.
    ds_bf16 = Downsample(C, use_conv=True, dims=2, out_channels=C, key=k_params,
                         compute_dtype=jnp.bfloat16)
    y_bf = jax.block_until_ready(ds_bf16(x))
    x_r = x.astype(jnp.bfloat16).astype(jnp.float32)
    w_r = ds_bf16.weight.astype(jnp.bfloat16).astype(jnp.float32)
    y_bf_ref = _conv_ref(x_r, w_r, ds_bf16.bias)
    assert jnp.allclose(y_bf, y_bf_ref, atol=5e-3, rtol=5e-3), \
        float(jnp.max(jnp.abs(y_bf - y_bf_ref)))

    # use_conv=False (2x2 average pool, stride 2).
    ds_pool = Downsample(C, use_conv=False, dims=2, key=k_params)
    y_pool = jax.block_until_ready(ds_pool(x))
    y_pool_ref = _pool_ref(x)
    assert y_pool.shape == (B, C, H // 2, W // 2), y_pool.shape
    assert jnp.allclose(y_pool, y_pool_ref, atol=1e-5, rtol=1e-5), \
        float(jnp.max(jnp.abs(y_pool - y_pool_ref)))

    print("KERNEL_OK")
</pallas_src>

<mosaic_0001>
module attributes {stable_mosaic.version = 11 : i64} {
  func.func @_conv3x3s2_kernel(%arg0: i32, %arg1: i32, %arg2: i32, %arg3: memref<4x1x9x9x4xf32, #tpu.memory_space<vmem>>, %arg4: memref<9x4x128xf32, #tpu.memory_space<vmem>>, %arg5: memref<1x128xf32, #tpu.memory_space<vmem>>, %arg6: memref<1x64x128xf32, #tpu.memory_space<vmem>>) attributes {dimension_semantics = [#tpu.dimension_semantics<parallel>, #tpu.dimension_semantics<parallel>, #tpu.dimension_semantics<parallel>], iteration_bounds = array<i64: 2, 1, 1>, scalar_prefetch = 0 : i64, scratch_operands = 0 : i64, tpu.core_type = #tpu.core_type<tc>, window_params = [{transform_indices = @transform_0, window_bounds = array<i64: 4, 1, 9, 9, 4>}, {transform_indices = @transform_1, window_bounds = array<i64: 9, 4, 128>}, {transform_indices = @transform_2, window_bounds = array<i64: 1, 128>}, {transform_indices = @transform_3, window_bounds = array<i64: 1, 64, 128>}]} {
    %c8_i32 = arith.constant 8 : i32
    %0 = arith.muli %arg2, %c8_i32 : i32
    %cst = arith.constant 0.000000e+00 : f32
    %1 = vector.broadcast %cst : f32 to vector<64x128xf32>
    %c0_i32 = arith.constant 0 : i32
    %2 = arith.addi %0, %c0_i32 : i32
    %c0 = arith.constant 0 : index
    %c0_0 = arith.constant 0 : index
    %3 = arith.index_cast %2 : i32 to index
    %c0_1 = arith.constant 0 : index
    %c0_2 = arith.constant 0 : index
    %4 = vector.load %arg3[%c0, %c0_0, %3, %c0_1, %c0_2] : memref<4x1x9x9x4xf32, #tpu.memory_space<vmem>>, vector<1x1x8x8x4xf32>
    %5 = vector.shape_cast %4 : vector<1x1x8x8x4xf32> to vector<8x8x4xf32>
    %6 = vector.shape_cast %5 : vector<8x8x4xf32> to vector<64x4xf32>
    %c0_3 = arith.constant 0 : index
    %c0_4 = arith.constant 0 : index
    %c0_5 = arith.constant 0 : index
    %7 = vector.load %arg4[%c0_3, %c0_4, %c0_5] : memref<9x4x128xf32, #tpu.memory_space<vmem>>, vector<1x4x128xf32>
    %8 = vector.shape_cast %7 : vector<1x4x128xf32> to vector<4x128xf32>
    %cst_6 = arith.constant dense<0.000000e+00> : vector<64x128xf32>
    %9 = tpu.matmul %6, %8, %cst_6 {dimension_numbers = #tpu.dot_dimension_numbers<[1], [0], [0], [1], [0, 0, 1, 1], [], []>} : vector<64x4xf32>, vector<4x128xf32>, vector<64x128xf32> -> vector<64x128xf32>
    %10 = arith.addf %1, %9 : vector<64x128xf32>
    %c0_i32_7 = arith.constant 0 : i32
    %11 = arith.addi %0, %c0_i32_7 : i32
    %c1 = arith.constant 1 : index
    %c0_8 = arith.constant 0 : index
    %12 = arith.index_cast %11 : i32 to index
    %c0_9 = arith.constant 0 : index
    %c0_10 = arith.constant 0 : index
    %13 = vector.load %arg3[%c1, %c0_8, %12, %c0_9, %c0_10] : memref<4x1x9x9x4xf32, #tpu.memory_space<vmem>>, vector<1x1x8x8x4xf32>
    %14 = vector.shape_cast %13 : vector<1x1x8x8x4xf32> to vector<8x8x4xf32>
    %15 = vector.shape_cast %14 : vector<8x8x4xf32> to vector<64x4xf32>
    %c1_11 = arith.constant 1 : index
    %c0_12 = arith.constant 0 : index
    %c0_13 = arith.constant 0 : index
    %16 = vector.load %arg4[%c1_11, %c0_12, %c0_13] : memref<9x4x128xf32, #tpu.memory_space<vmem>>, vector<1x4x128xf32>
    %17 = vector.shape_cast %16 : vector<1x4x128xf32> to vector<4x128xf32>
    %cst_14 = arith.constant dense<0.000000e+00> : vector<64x128xf32>
    %18 = tpu.matmul %15, %17, %cst_14 {dimension_numbers = #tpu.dot_dimension_numbers<[1], [0], [0], [1], [0, 0, 1, 1], [], []>} : vector<64x4xf32>, vector<4x128xf32>, vector<64x128xf32> -> vector<64x128xf32>
    %19 = arith.addf %10, %18 : vector<64x128xf32>
    %c0_i32_15 = arith.constant 0 : i32
    %20 = arith.addi %0, %c0_i32_15 : i32
    %c0_16 = arith.constant 0 : index
    %c0_17 = arith.constant 0 : index
    %21 = arith.index_cast %20 : i32 to index
    %c1_18 = arith.constant 1 : index
    %c0_19 = arith.constant 0 : index
    %22 = vector.load %arg3[%c0_16, %c0_17, %21, %c1_18, %c0_19] : memref<4x1x9x9x4xf32, #tpu.memory_space<vmem>>, vector<1x1x8x8x4xf32>
    %23 = vector.shape_cast %22 : vector<1x1x8x8x4xf32> to vector<8x8x4xf32>
    %24 = vector.shape_cast %23 : vector<8x8x4xf32> to vector<64x4xf32>
    %c2 = arith.constant 2 : index
    %c0_20 = arith.constant 0 : index
    %c0_21 = arith.constant 0 : index
    %25 = vector.load %arg4[%c2, %c0_20, %c0_21] : memref<9x4x128xf32, #tpu.memory_space<vmem>>, vector<1x4x128xf32>
    %26 = vector.shape_cast %25 : vector<1x4x128xf32> to vector<4x128xf32>
    %cst_22 = arith.constant dense<0.000000e+00> : vector<64x128xf32>
    %27 = tpu.matmul %24, %26, %cst_22 {dimension_numbers = #tpu.dot_dimension_numbers<[1], [0], [0], [1], [0, 0, 1, 1], [], []>} : vector<64x4xf32>, vector<4x128xf32>, vector<64x128xf32> -> vector<64x128xf32>
    %28 = arith.addf %19, %27 : vector<64x128xf32>
    %c0_i32_23 = arith.constant 0 : i32
    %29 = arith.addi %0, %c0_i32_23 : i32
    %c2_24 = arith.constant 2 : index
    %c0_25 = arith.constant 0 : index
    %30 = arith.index_cast %29 : i32 to index
    %c0_26 = arith.constant 0 : index
    %c0_27 = arith.constant 0 : index
    %31 = vector.load %arg3[%c2_24, %c0_25, %30, %c0_26, %c0_27] : memref<4x1x9x9x4xf32, #tpu.memory_space<vmem>>, vector<1x1x8x8x4xf32>
    %32 = vector.shape_cast %31 : vector<1x1x8x8x4xf32> to vector<8x8x4xf32>
    %33 = vector.shape_cast %32 : vector<8x8x4xf32> to vector<64x4xf32>
    %c3 = arith.constant 3 : index
    %c0_28 = arith.constant 0 : index
    %c0_29 = arith.constant 0 : index
    %34 = vector.load %arg4[%c3, %c0_28, %c0_29] : memref<9x4x128xf32, #tpu.memory_space<vmem>>, vector<1x4x128xf32>
    %35 = vector.shape_cast %34 : vector<1x4x128xf32> to vector<4x128xf32>
    %cst_30 = arith.constant dense<0.000000e+00> : vector<64x128xf32>
    %36 = tpu.matmul %33, %35, %cst_30 {dimension_numbers = #tpu.dot_dimension_numbers<[1], [0], [0], [1], [0, 0, 1, 1], [], []>} : vector<64x4xf32>, vector<4x128xf32>, vector<64x128xf32> -> vector<64x128xf32>
    %37 = arith.addf %28, %36 : vector<64x128xf32>
    %c0_i32_31 = arith.constant 0 : i32
    %38 = arith.addi %0, %c0_i32_31 : i32
    %c3_32 = arith.constant 3 : index
    %c0_33 = arith.constant 0 : index
    %39 = arith.index_cast %38 : i32 to index
    %c0_34 = arith.constant 0 : index
    %c0_35 = arith.constant 0 : index
    %40 = vector.load %arg3[%c3_32, %c0_33, %39, %c0_34, %c0_35] : memref<4x1x9x9x4xf32, #tpu.memory_space<vmem>>, vector<1x1x8x8x4xf32>
    %41 = vector.shape_cast %40 : vector<1x1x8x8x4xf32> to vector<8x8x4xf32>
    %42 = vector.shape_cast %41 : vector<8x8x4xf32> to vector<64x4xf32>
    %c4 = arith.constant 4 : index
    %c0_36 = arith.constant 0 : index
    %c0_37 = arith.constant 0 : index
    %43 = vector.load %arg4[%c4, %c0_36, %c0_37] : memref<9x4x128xf32, #tpu.memory_space<vmem>>, vector<1x4x128xf32>
    %44 = vector.shape_cast %43 : vector<1x4x128xf32> to vector<4x128xf32>
    %cst_38 = arith.constant dense<0.000000e+00> : vector<64x128xf32>
    %45 = tpu.matmul %42, %44, %cst_38 {dimension_numbers = #tpu.dot_dimension_numbers<[1], [0], [0], [1], [0, 0, 1, 1], [], []>} : vector<64x4xf32>, vector<4x128xf32>, vector<64x128xf32> -> vector<64x128xf32>
    %46 = arith.addf %37, %45 : vector<64x128xf32>
    %c0_i32_39 = arith.constant 0 : i32
    %47 = arith.addi %0, %c0_i32_39 : i32
    %c2_40 = arith.constant 2 : index
    %c0_41 = arith.constant 0 : index
    %48 = arith.index_cast %47 : i32 to index
    %c1_42 = arith.constant 1 : index
    %c0_43 = arith.constant 0 : index
    %49 = vector.load %arg3[%c2_40, %c0_41, %48, %c1_42, %c0_43] : memref<4x1x9x9x4xf32, #tpu.memory_space<vmem>>, vector<1x1x8x8x4xf32>
    %50 = vector.shape_cast %49 : vector<1x1x8x8x4xf32> to vector<8x8x4xf32>
    %51 = vector.shape_cast %50 : vector<8x8x4xf32> to vector<64x4xf32>
    %c5 = arith.constant 5 : index
    %c0_44 = arith.constant 0 : index
    %c0_45 = arith.constant 0 : index
    %52 = vector.load %arg4[%c5, %c0_44, %c0_45] : memref<9x4x128xf32, #tpu.memory_space<vmem>>, vector<1x4x128xf32>
    %53 = vector.shape_cast %52 : vector<1x4x128xf32> to vector<4x128xf32>
    %cst_46 = arith.constant dense<0.000000e+00> : vector<64x128xf32>
    %54 = tpu.matmul %51, %53, %cst_46 {dimension_numbers = #tpu.dot_dimension_numbers<[1], [0], [0], [1], [0, 0, 1, 1], [], []>} : vector<64x4xf32>, vector<4x128xf32>, vector<64x128xf32> -> vector<64x128xf32>
    %55 = arith.addf %46, %54 : vector<64x128xf32>
    %c1_i32 = arith.constant 1 : i32
    %56 = arith.addi %0, %c1_i32 : i32
    %c0_47 = arith.constant 0 : index
    %c0_48 = arith.constant 0 : index
    %57 = arith.index_cast %56 : i32 to index
    %c0_49 = arith.constant 0 : index
    %c0_50 = arith.constant 0 : index
    %58 = vector.load %arg3[%c0_47, %c0_48, %57, %c0_49, %c0_50] : memref<4x1x9x9x4xf32, #tpu.memory_space<vmem>>, vector<1x1x8x8x4xf32>
    %59 = vector.shape_cast %58 : vector<1x1x8x8x4xf32> to vector<8x8x4xf32>
    %60 = vector.shape_cast %59 : vector<8x8x4xf32> to vector<64x4xf32>
    %c6 = arith.constant 6 : index
    %c0_51 = arith.constant 0 : index
    %c0_52 = arith.constant 0 : index
    %61 = vector.load %arg4[%c6, %c0_51, %c0_52] : memref<9x4x128xf32, #tpu.memory_space<vmem>>, vector<1x4x128xf32>
    %62 = vector.shape_cast %61 : vector<1x4x128xf32> to vector<4x128xf32>
    %cst_53 = arith.constant dense<0.000000e+00> : vector<64x128xf32>
    %63 = tpu.matmul %60, %62, %cst_53 {dimension_numbers = #tpu.dot_dimension_numbers<[1], [0], [0], [1], [0, 0, 1, 1], [], []>} : vector<64x4xf32>, vector<4x128xf32>, vector<64x128xf32> -> vector<64x128xf32>
    %64 = arith.addf %55, %63 : vector<64x128xf32>
    %c1_i32_54 = arith.constant 1 : i32
    %65 = arith.addi %0, %c1_i32_54 : i32
    %c1_55 = arith.constant 1 : index
    %c0_56 = arith.constant 0 : index
    %66 = arith.index_cast %65 : i32 to index
    %c0_57 = arith.constant 0 : index
    %c0_58 = arith.constant 0 : index
    %67 = vector.load %arg3[%c1_55, %c0_56, %66, %c0_57, %c0_58] : memref<4x1x9x9x4xf32, #tpu.memory_space<vmem>>, vector<1x1x8x8x4xf32>
    %68 = vector.shape_cast %67 : vector<1x1x8x8x4xf32> to vector<8x8x4xf32>
    %69 = vector.shape_cast %68 : vector<8x8x4xf32> to vector<64x4xf32>
    %c7 = arith.constant 7 : index
    %c0_59 = arith.constant 0 : index
    %c0_60 = arith.constant 0 : index
    %70 = vector.load %arg4[%c7, %c0_59, %c0_60] : memref<9x4x128xf32, #tpu.memory_space<vmem>>, vector<1x4x128xf32>
    %71 = vector.shape_cast %70 : vector<1x4x128xf32> to vector<4x128xf32>
    %cst_61 = arith.constant dense<0.000000e+00> : vector<64x128xf32>
    %72 = tpu.matmul %69, %71, %cst_61 {dimension_numbers = #tpu.dot_dimension_numbers<[1], [0], [0], [1], [0, 0, 1, 1], [], []>} : vector<64x4xf32>, vector<4x128xf32>, vector<64x128xf32> -> vector<64x128xf32>
    %73 = arith.addf %64, %72 : vector<64x128xf32>
    %c1_i32_62 = arith.constant 1 : i32
    %74 = arith.addi %0, %c1_i32_62 : i32
    %c0_63 = arith.constant 0 : index
    %c0_64 = arith.constant 0 : index
    %75 = arith.index_cast %74 : i32 to index
    %c1_65 = arith.constant 1 : index
    %c0_66 = arith.constant 0 : index
    %76 = vector.load %arg3[%c0_63, %c0_64, %75, %c1_65, %c0_66] : memref<4x1x9x9x4xf32, #tpu.memory_space<vmem>>, vector<1x1x8x8x4xf32>
    %77 = vector.shape_cast %76 : vector<1x1x8x8x4xf32> to vector<8x8x4xf32>
    %78 = vector.shape_cast %77 : vector<8x8x4xf32> to vector<64x4xf32>
    %c8 = arith.constant 8 : index
    %c0_67 = arith.constant 0 : index
    %c0_68 = arith.constant 0 : index
    %79 = vector.load %arg4[%c8, %c0_67, %c0_68] : memref<9x4x128xf32, #tpu.memory_space<vmem>>, vector<1x4x128xf32>
    %80 = vector.shape_cast %79 : vector<1x4x128xf32> to vector<4x128xf32>
    %cst_69 = arith.constant dense<0.000000e+00> : vector<64x128xf32>
    %81 = tpu.matmul %78, %80, %cst_69 {dimension_numbers = #tpu.dot_dimension_numbers<[1], [0], [0], [1], [0, 0, 1, 1], [], []>} : vector<64x4xf32>, vector<4x128xf32>, vector<64x128xf32> -> vector<64x128xf32>
    %82 = arith.addf %73, %81 : vector<64x128xf32>
    %c0_70 = arith.constant 0 : index
    %c0_71 = arith.constant 0 : index
    %83 = vector.load %arg5[%c0_70, %c0_71] : memref<1x128xf32, #tpu.memory_space<vmem>>, vector<1x128xf32>
    %84 = vector.broadcast %83 : vector<1x128xf32> to vector<64x128xf32>
    %85 = arith.addf %82, %84 : vector<64x128xf32>
    %c0_72 = arith.constant 0 : index
    %c0_73 = arith.constant 0 : index
    %c0_74 = arith.constant 0 : index
    %86 = vector.load %arg6[%c0_72, %c0_73, %c0_74] : memref<1x64x128xf32, #tpu.memory_space<vmem>>, vector<1x64x128xf32>
    %87 = vector.shape_cast %86 : vector<1x64x128xf32> to vector<64x128xf32>
    %88 = vector.shape_cast %85 : vector<64x128xf32> to vector<1x64x128xf32>
    tpu.vector_store %arg6[%c0_72, %c0_73, %c0_74], %88 {strides = array<i32>} : memref<1x64x128xf32, #tpu.memory_space<vmem>>, vector<1x64x128xf32>,
    return
  }
  func.func @transform_0(%arg0: i32, %arg1: i32, %arg2: i32) -> (i32, i32, i32, i32, i32) {
    %c0_i32 = arith.constant 0 : i32
    %c0_i32_0 = arith.constant 0 : i32
    %c0_i32_1 = arith.constant 0 : i32
    %c0_i32_2 = arith.constant 0 : i32
    %c0_i32_3 = arith.constant 0 : i32
    return %c0_i32, %arg0, %c0_i32_0, %c0_i32_1, %c0_i32_2 : i32, i32, i32, i32, i32
  }
  func.func @transform_1(%arg0: i32, %arg1: i32, %arg2: i32) -> (i32, i32, i32) {
    %c0_i32 = arith.constant 0 : i32
    %c0_i32_0 = arith.constant 0 : i32
    %c0_i32_1 = arith.constant 0 : i32
    return %c0_i32, %c0_i32_0, %arg1 : i32, i32, i32
  }
  func.func @transform_2(%arg0: i32, %arg1: i32, %arg2: i32) -> (i32, i32) {
    %c0_i32 = arith.constant 0 : i32
    %c0_i32_0 = arith.constant 0 : i32
    return %c0_i32, %arg1 : i32, i32
  }
  func.func @transform_3(%arg0: i32, %arg1: i32, %arg2: i32) -> (i32, i32, i32) {
    %c0_i32 = arith.constant 0 : i32
    return %arg0, %arg2, %arg1 : i32, i32, i32
  }
}

</mosaic_0001>

<llo_original>
// kernel: tpu_custom_call.1
$region0: #{tpu_custom_call.1}
  #allocation0 [shape = 'u32[]', space=smem, size = 0x4, offset = 0x4, fixed_abs, tag = 'smem constant byte address 0x4 - core index']
  #allocation1 [shape = 'u32[144,128]{1,0:T(1,128)}', space=vmem, size = 0x12000, scoped, tag = 'internal scratch']
  %s0 = inlined_call_operand.vmem [shape: f32[4,2,9,9,4], index: 0, kind: input, shape index: {}]
  %s1 = inlined_call_operand.vmem [shape: f32[9,4,128], index: 1, kind: input, shape index: {}]
  %s2 = inlined_call_operand.vmem [shape: f32[1,128], index: 2, kind: input, shape index: {}]
  %s3 = inlined_call_operand.hbm [shape: f32[2,64,128], index: 3, kind: output, shape index: {}]
  %s4 = sld [smem:[#allocation0]]
  $region83: #{tpu_custom_call.1} parent=0
    _
  %s6 = ssub.s32 1, %s4
  %s7 = scalar_select 0, %s6, %s4
  $region1: #{tpu_custom_call.1} parent=0
    #allocation2 [shape = 'u8[589824]{0}', space=vmem, size = 0x90000, scoped, tag = 'input window, operand 0']
    #allocation3 [shape = 'u8[65536]{0}', space=vmem, size = 0x10000, scoped, tag = 'output window, operand 0']
    #allocation4 [shape = 's32[2]{0}', space=sflag, size = 0x8, scoped, tag = 'scoped memory for tpu_custom_call.1']
    %8 = vsyncpa [#allocation4], 0
    %s9 = scalar_lea.sflag [#allocation4], 1
    %10 = vsyncpa %s9, 0
    loop: start=0, step=1, limit=4
    $region2: #{tpu_custom_call.1} parent=1 // loop_pre_header
      _
    $region3: #{tpu_custom_call.1} parent=1 // loop_header
      %s12 = sphi 0, %s16
      %p13 = scmp.ge.s32.totalorder %s12, 4
      %s19 = sphi 0, %s38
      %s20 = sphi 0, %s34
      %s21 = sphi 0, %s30
      %s22 = sphi 0, %s19
      %s23 = sphi 0, %s20
      %s24 = sphi 0, %s21
      %s25 = sphi 0, %s22
      %s26 = sphi 0, %s23
      %s27 = sphi 0, %s24
      %s41 = sphi 0, %s43
      %s44 = sphi 0, %s41
      %s45 = sphi 0, %s44
      %s61 = sphi 0, %s45
      %s67 = sphi 0, %s69
      %s70 = sphi 0, %s67
      %s71 = sphi 0, %s70
      %s87 = sphi 0, %s71
      %s93 = sphi 0, %s95
      %s96 = sphi 0, %s93
      %s97 = sphi 0, %s96
      %s113 = sphi 0, %s97
      %s123 = sphi 0, %s125
      %s126 = sphi 0, %s123
      %s127 = sphi 0, %s126
      %s143 = sphi 0, %s127
    $region4: #{tpu_custom_call.1} parent=1 // loop_header_branch
      %15 = sbr.rel (%p13) target = $region8
    $region5: #{tpu_custom_call.1} parent=1 // loop_body
      %s17 = ssub.s32 %s12, 1
      %s18 = ssub.s32 %s12, 2
      %s28 = sadd.s32 1, %s21
      %p29 = scmp.ge.s32.totalorder %s28, 1
      %s30 = scalar_select %p29, 0, %s28
      %s31 = sadd.s32 1, %s20
      %s32 = scalar_select %p29, %s31, %s20
      %p33 = scmp.ge.s32.totalorder %s32, 1
      %s34 = scalar_select %p33, 0, %s32
      %s35 = sadd.s32 1, %s19
      %s36 = scalar_select %p33, %s35, %s19
      %p37 = scmp.ge.s32.totalorder %s36, 2
      %s38 = scalar_select %p37, 0, %s36
      %s39 = ssub.s32 %s19, %s38
      %p40 = scmp.eq.s32.totalorder %s39, 0
      %s42 = sadd.s32 %s41, 1
      %s43 = scalar_select %p40, %s41, %s42
      %p46 = pneg %p40
      %p47 = scmp.eq.s32.totalorder %s12, 1
      %p48 = por %p46, %p47
      %p49 = scmp.ne.s32.totalorder %s41, %s44
      %p50 = scmp.eq.s32.totalorder %s12, 0
      %p51 = por %p49, %p50
      %p52 = scmp.ne.s32.totalorder %s41, %s44
      %p53 = scmp.eq.s32.totalorder %s17, 1
      %p54 = por %p52, %p53
      %p55 = scmp.ne.s32.totalorder %s44, %s45
      %p56 = scmp.eq.s32.totalorder %s17, 0
      %p57 = por %p55, %p56
      %p58 = scmp.ne.s32.totalorder %s44, %s45
      %p59 = scmp.eq.s32.totalorder %s18, 1
      %p60 = por %p58, %p59
      %p62 = scmp.ne.s32.totalorder %s45, %s61
      %p63 = scmp.eq.s32.totalorder %s18, 0
      %p64 = por %p62, %p63
      %s65 = ssub.s32 %s20, %s34
      %p66 = scmp.eq.s32.totalorder %s65, 0
      %s68 = sadd.s32 %s67, 1
      %s69 = scalar_select %p66, %s67, %s68
      %p72 = pneg %p66
      %p73 = scmp.eq.s32.totalorder %s12, 1
      %p74 = por %p72, %p73
      %p75 = scmp.ne.s32.totalorder %s67, %s70
      %p76 = scmp.eq.s32.totalorder %s12, 0
      %p77 = por %p75, %p76
      %p78 = scmp.ne.s32.totalorder %s67, %s70
      %p79 = scmp.eq.s32.totalorder %s17, 1
      %p80 = por %p78, %p79
      %p81 = scmp.ne.s32.totalorder %s70, %s71
      %p82 = scmp.eq.s32.totalorder %s17, 0
      %p83 = por %p81, %p82
      %p84 = scmp.ne.s32.totalorder %s70, %s71
      %p85 = scmp.eq.s32.totalorder %s18, 1
      %p86 = por %p84, %p85
      %p88 = scmp.ne.s32.totalorder %s71, %s87
      %p89 = scmp.eq.s32.totalorder %s18, 0
      %p90 = por %p88, %p89
      %s91 = ssub.s32 %s20, %s34
      %p92 = scmp.eq.s32.totalorder %s91, 0
      %s94 = sadd.s32 %s93, 1
      %s95 = scalar_select %p92, %s93, %s94
      %p98 = pneg %p92
      %p99 = scmp.eq.s32.totalorder %s12, 1
      %p100 = por %p98, %p99
      %p101 = scmp.ne.s32.totalorder %s93, %s96
      %p102 = scmp.eq.s32.totalorder %s12, 0
      %p103 = por %p101, %p102
      %p104 = scmp.ne.s32.totalorder %s93, %s96
      %p105 = scmp.eq.s32.totalorder %s17, 1
      %p106 = por %p104, %p105
      %p107 = scmp.ne.s32.totalorder %s96, %s97
      %p108 = scmp.eq.s32.totalorder %s17, 0
      %p109 = por %p107, %p108
      %p110 = scmp.ne.s32.totalorder %s96, %s97
      %p111 = scmp.eq.s32.totalorder %s18, 1
      %p112 = por %p110, %p111
      %p114 = scmp.ne.s32.totalorder %s97, %s113
      %p115 = scmp.eq.s32.totalorder %s18, 0
      %p116 = por %p114, %p115
      %s117 = ssub.s32 %s19, %s38
      %s118 = ssub.s32 %s21, %s30
      %s119 = sor.u32 %s117, %s118
      %s120 = ssub.s32 %s20, %s34
      %s121 = sor.u32 %s119, %s120
      %p122 = scmp.eq.s32.totalorder %s121, 0
      %s124 = sadd.s32 %s123, 1
      %s125 = scalar_select %p122, %s123, %s124
      %p128 = pneg %p122
      %p129 = scmp.eq.s32.totalorder %s12, 1
      %p130 = por %p128, %p129
      %p131 = scmp.ne.s32.totalorder %s123, %s126
      %p132 = scmp.eq.s32.totalorder %s12, 0
      %p133 = por %p131, %p132
      %p134 = scmp.ne.s32.totalorder %s123, %s126
      %p135 = scmp.eq.s32.totalorder %s17, 1
      %p136 = por %p134, %p135
      %p137 = scmp.ne.s32.totalorder %s126, %s127
      %p138 = scmp.eq.s32.totalorder %s17, 0
      %p139 = por %p137, %p138
      %p140 = scmp.ne.s32.totalorder %s126, %s127
      %p141 = scmp.eq.s32.totalorder %s18, 1
      %p142 = por %p140, %p141
      %p144 = scmp.ne.s32.totalorder %s127, %s143
      %p145 = scmp.eq.s32.totalorder %s18, 0
      %p146 = por %p144, %p145
      %p147 = scmp.le.s32.totalorder 1, %s12
      %p148 = scmp.lt.s32.totalorder %s12, 3
      %p149 = pnand %p147, %p148
      %p150 = pneg %p149
      // Predicated region
      $region9: #{tpu_custom_call.1} parent=5 // pred_check
        _
      $region10: #{tpu_custom_call.1} parent=5 // pred_check_branch
        %152 = sbr.rel (%p149) target = $region12
      $region11: #{tpu_custom_call.1} parent=5 // pred_region
        %s153 = ssub.s32 %s12, 1
        // Predicated region
        $region13: #{tpu_custom_call.1} parent=11 // pred_check
          %p154 = pneg %p83
        $region14: #{tpu_custom_call.1} parent=11 // pred_check_branch
          %156 = sbr.rel (%p154) target = $region16
        $region15: #{tpu_custom_call.1} parent=11 // pred_region
          %p157 = scmp.lt.s32.totalorder %s23, 0
          %s158 = scalar_select %p157, %s23, 0
          %s159 = smul.addr %s158, 4
          %s160 = scalar_lea.vmem %s1, %s159
        $region16: #{tpu_custom_call.1} parent=11 // pred_fallthru
          _
        // Predicated region
        $region17: #{tpu_custom_call.1} parent=11 // pred_check
          %p161 = pneg %p109
        $region18: #{tpu_custom_call.1} parent=11 // pred_check_branch
          %163 = sbr.rel (%p161) target = $region20
        $region19: #{tpu_custom_call.1} parent=11 // pred_region
          %p164 = scmp.lt.s32.totalorder %s23, 0
          %s165 = scalar_select %p164, %s23, 0
          %s166 = scalar_lea.vmem %s2, %s165
        $region20: #{tpu_custom_call.1} parent=11 // pred_fallthru
          _
      $region12: #{tpu_custom_call.1} parent=5 // pred_fallthru
        _
      %p167 = scmp.lt.s32.totalorder %s12, 2
      // Predicated region
      $region21: #{tpu_custom_call.1} parent=5 // pred_check
        %p168 = pneg %p167
      $region22: #{tpu_custom_call.1} parent=5 // pred_check_branch
        %170 = sbr.rel (%p168) target = $region24
      $region23: #{tpu_custom_call.1} parent=5 // pred_region
        // Predicated region
        $region25: #{tpu_custom_call.1} parent=23 // pred_check
          %p171 = pneg %p51
        $region26: #{tpu_custom_call.1} parent=23 // pred_check_branch
          %173 = sbr.rel (%p171) target = $region28
        $region27: #{tpu_custom_call.1} parent=23 // pred_region
          %s174 = sand.u32 %s41, 1
          %s175 = sand.u32 %s41, 1
          %s176 = smul.addr %s175, 576
          %s177 = scalar_lea.vmem [#allocation2], %s176
          %s178 = smul.addr %s19, 18
          %s179 = smul.addr %s178, 8
          %s180 = scalar_lea.vmem %s0, %s179
          // Predicated region
          $region29: #{tpu_custom_call.1} parent=27 // pred_check
            _
          $region30: #{tpu_custom_call.1} parent=27 // pred_check_branch
            %182 = sbr.rel (0) target = $region32
          $region31: #{tpu_custom_call.1} parent=27 // pred_region
            // Predicated region
            $region33: #{tpu_custom_call.1} parent=31 // pred_check
              _
            $region34: #{tpu_custom_call.1} parent=31 // pred_check_branch
              %184 = sbr.rel (0) target = $region36
            $region35: #{tpu_custom_call.1} parent=31 // pred_region
              // Predicated region
              $region48: #{tpu_custom_call.1} parent=35 // pred_check
                _
              $region49: #{tpu_custom_call.1} parent=35 // pred_check_branch
                %341 = sbr.rel (0) target = $region51
              $region50: #{tpu_custom_call.1} parent=35 // pred_region
                loop: start=0, step=1, limit=1
                $region52: #{tpu_custom_call.1} parent=50 // loop_pre_header
                  _
                $region53: #{tpu_custom_call.1} parent=50 // loop_header
                  %s343 = sphi 0, %s347
                  %p344 = scmp.ge.s32.totalorder %s343, 1
                  %s348 = sphi %s180, %s180
                  %s349 = sphi %s177, %s177
                $region54: #{tpu_custom_call.1} parent=50 // loop_header_branch
                  %346 = sbr.rel (%p344) target = $region58
                $region55: #{tpu_custom_call.1} parent=50 // loop_body
                  %v350 = vld [vmem:[%s348] sm:$0xff]
                  %351 = vst [vmem:[%s349] sm:$0xff] %v350
                  %v352 = vld [vmem:[%s348 + $0x8] sm:$0xff]
                  %353 = vst [vmem:[%s349 + $0x8] sm:$0xff] %v352
                  %v354 = vld [vmem:[%s348 + $0x10] sm:$0xff]
                  %355 = vst [vmem:[%s349 + $0x10] sm:$0xff] %v354
                  %v356 = vld [vmem:[%s348 + $0x18] sm:$0xff]
                  %357 = vst [vmem:[%s349 + $0x18] sm:$0xff] %v356
                  %v358 = vld [vmem:[%s348 + $0x20] sm:$0xff]
                  %359 = vst [vmem:[%s349 + $0x20] sm:$0xff] %v358
                  %v360 = vld [vmem:[%s348 + $0x28] sm:$0xff]
                  %361 = vst [vmem:[%s349 + $0x28] sm:$0xff] %v360
                  %v362 = vld [vmem:[%s348 + $0x30] sm:$0xff]
                  %363 = vst [vmem:[%s349 + $0x30] sm:$0xff] %v362
                  %v364 = vld [vmem:[%s348 + $0x38] sm:$0xff]
                  %365 = vst [vmem:[%s349 + $0x38] sm:$0xff] %v364
                  %v366 = vld [vmem:[%s348 + $0x40] sm:$0xff]
                  %367 = vst [vmem:[%s349 + $0x40] sm:$0xff] %v366
                  %v368 = vld [vmem:[%s348 + $0x48] sm:$0xff]
                  %369 = vst [vmem:[%s349 + $0x48] sm:$0xff] %v368
                  %v370 = vld [vmem:[%s348 + $0x50] sm:$0xff]
                  %371 = vst [vmem:[%s349 + $0x50] sm:$0xff] %v370
                  %v372 = vld [vmem:[%s348 + $0x58] sm:$0xff]
                  %373 = vst [vmem:[%s349 + $0x58] sm:$0xff] %v372
                  %v374 = vld [vmem:[%s348 + $0x60] sm:$0xff]
                  %375 = vst [vmem:[%s349 + $0x60] sm:$0xff] %v374
                  %v376 = vld [vmem:[%s348 + $0x68] sm:$0xff]
                  %377 = vst [vmem:[%s349 + $0x68] sm:$0xff] %v376
                  %v378 = vld [vmem:[%s348 + $0x70] sm:$0xff]
                  %379 = vst [vmem:[%s349 + $0x70] sm:$0xff] %v378
                  %v380 = vld [vmem:[%s348 + $0x78] sm:$0xff]
                  %381 = vst [vmem:[%s349 + $0x78] sm:$0xff] %v380
                  %v382 = vld [vmem:[%s348 + $0x80] sm:$0xff]
                  %383 = vst [vmem:[%s349 + $0x80] sm:$0xff] %v382
                  %v384 = vld [vmem:[%s348 + $0x88] sm:$0xff]
                  %385 = vst [vmem:[%s349 + $0x88] sm:$0xff] %v384
                  %v386 = vld [vmem:[%s348 + $0x120] sm:$0xff]
                  %387 = vst [vmem:[%s349 + $0x90] sm:$0xff] %v386
                  %v388 = vld [vmem:[%s348 + $0x128] sm:$0xff]
                  %389 = vst [vmem:[%s349 + $0x98] sm:$0xff] %v388
                  %v390 = vld [vmem:[%s348 + $0x130] sm:$0xff]
                  %391 = vst [vmem:[%s349 + $0xa0] sm:$0xff] %v390
                  %v392 = vld [vmem:[%s348 + $0x138] sm:$0xff]
                  %393 = vst [vmem:[%s349 + $0xa8] sm:$0xff] %v392
                  %v394 = vld [vmem:[%s348 + $0x140] sm:$0xff]
                  %395 = vst [vmem:[%s349 + $0xb0] sm:$0xff] %v394
                  %v396 = vld [vmem:[%s348 + $0x148] sm:$0xff]
                  %397 = vst [vmem:[%s349 + $0xb8] sm:$0xff] %v396
                  %v398 = vld [vmem:[%s348 + $0x150] sm:$0xff]
                  %399 = vst [vmem:[%s349 + $0xc0] sm:$0xff] %v398
                  %v400 = vld [vmem:[%s348 + $0x158] sm:$0xff]
                  %401 = vst [vmem:[%s349 + $0xc8] sm:$0xff] %v400
                  %v402 = vld [vmem:[%s348 + $0x160] sm:$0xff]
                  %403 = vst [vmem:[%s349 + $0xd0] sm:$0xff] %v402
                  %v404 = vld [vmem:[%s348 + $0x168] sm:$0xff]
                  %405 = vst [vmem:[%s349 + $0xd8] sm:$0xff] %v404
                  %v406 = vld [vmem:[%s348 + $0x170] sm:$0xff]
                  %407 = vst [vmem:[%s349 + $0xe0] sm:$0xff] %v406
                  %v408 = vld [vmem:[%s348 + $0x178] sm:$0xff]
                  %409 = vst [vmem:[%s349 + $0xe8] sm:$0xff] %v408
                  %v410 = vld [vmem:[%s348 + $0x180] sm:$0xff]
                  %411 = vst [vmem:[%s349 + $0xf0] sm:$0xff] %v410
                  %v412 = vld [vmem:[%s348 + $0x188] sm:$0xff]
                  %413 = vst [vmem:[%s349 + $0xf8] sm:$0xff] %v412
                  %v414 = vld [vmem:[%s348 + $0x190] sm:$0xff]
                  %415 = vst [vmem:[%s349 + $0x100] sm:$0xff] %v414
                  %v416 = vld [vmem:[%s348 + $0x198] sm:$0xff]
                  %417 = vst [vmem:[%s349 + $0x108] sm:$0xff] %v416
                  %v418 = vld [vmem:[%s348 + $0x1a0] sm:$0xff]
                  %419 = vst [vmem:[%s349 + $0x110] sm:$0xff] %v418
                  %v420 = vld [vmem:[%s348 + $0x1a8] sm:$0xff]
                  %421 = vst [vmem:[%s349 + $0x118] sm:$0xff] %v420
                  %v422 = vld [vmem:[%s348 + $0x240] sm:$0xff]
                  %423 = vst [vmem:[%s349 + $0x120] sm:$0xff] %v422
                  %v424 = vld [vmem:[%s348 + $0x248] sm:$0xff]
                  %425 = vst [vmem:[%s349 + $0x128] sm:$0xff] %v424
                  %v426 = vld [vmem:[%s348 + $0x250] sm:$0xff]
                  %427 = vst [vmem:[%s349 + $0x130] sm:$0xff] %v426
                  %v428 = vld [vmem:[%s348 + $0x258] sm:$0xff]
                  %429 = vst [vmem:[%s349 + $0x138] sm:$0xff] %v428
                  %v430 = vld [vmem:[%s348 + $0x260] sm:$0xff]
                  %431 = vst [vmem:[%s349 + $0x140] sm:$0xff] %v430
                  %v432 = vld [vmem:[%s348 + $0x268] sm:$0xff]
                  %433 = vst [vmem:[%s349 + $0x148] sm:$0xff] %v432
                  %v434 = vld [vmem:[%s348 + $0x270] sm:$0xff]
                  %435 = vst [vmem:[%s349 + $0x150] sm:$0xff] %v434
                  %v436 = vld [vmem:[%s348 + $0x278] sm:$0xff]
                  %437 = vst [vmem:[%s349 + $0x158] sm:$0xff] %v436
                  %v438 = vld [vmem:[%s348 + $0x280] sm:$0xff]
                  %439 = vst [vmem:[%s349 + $0x160] sm:$0xff] %v438
                  %v440 = vld [vmem:[%s348 + $0x288] sm:$0xff]
                  %441 = vst [vmem:[%s349 + $0x168] sm:$0xff] %v440
                  %v442 = vld [vmem:[%s348 + $0x290] sm:$0xff]
                  %443 = vst [vmem:[%s349 + $0x170] sm:$0xff] %v442
                  %v444 = vld [vmem:[%s348 + $0x298] sm:$0xff]
                  %445 = vst [vmem:[%s349 + $0x178] sm:$0xff] %v444
                  %v446 = vld [vmem:[%s348 + $0x2a0] sm:$0xff]
                  %447 = vst [vmem:[%s349 + $0x180] sm:$0xff] %v446
                  %v448 = vld [vmem:[%s348 + $0x2a8] sm:$0xff]
                  %449 = vst [vmem:[%s349 + $0x188] sm:$0xff] %v448
                  %v450 = vld [vmem:[%s348 + $0x2b0] sm:$0xff]
                  %451 = vst [vmem:[%s349 + $0x190] sm:$0xff] %v450
                  %v452 = vld [vmem:[%s348 + $0x2b8] sm:$0xff]
                  %453 = vst [vmem:[%s349 + $0x198] sm:$0xff] %v452
                  %v454 = vld [vmem:[%s348 + $0x2c0] sm:$0xff]
                  %455 = vst [vmem:[%s349 + $0x1a0] sm:$0xff] %v454
                  %v456 = vld [vmem:[%s348 + $0x2c8] sm:$0xff]
                  %457 = vst [vmem:[%s349 + $0x1a8] sm:$0xff] %v456
                  %v458 = vld [vmem:[%s348 + $0x360] sm:$0xff]
                  %459 = vst [vmem:[%s349 + $0x1b0] sm:$0xff] %v458
                  %v460 = vld [vmem:[%s348 + $0x368] sm:$0xff]
                  %461 = vst [vmem:[%s349 + $0x1b8] sm:$0xff] %v460
                  %v462 = vld [vmem:[%s348 + $0x370] sm:$0xff]
                  %463 = vst [vmem:[%s349 + $0x1c0] sm:$0xff] %v462
                  %v464 = vld [vmem:[%s348 + $0x378] sm:$0xff]
                  %465 = vst [vmem:[%s349 + $0x1c8] sm:$0xff] %v464
                  %v466 = vld [vmem:[%s348 + $0x380] sm:$0xff]
                  %467 = vst [vmem:[%s349 + $0x1d0] sm:$0xff] %v466
                  %v468 = vld [vmem:[%s348 + $0x388] sm:$0xff]
                  %469 = vst [vmem:[%s349 + $0x1d8] sm:$0xff] %v468
                  %v470 = vld [vmem:[%s348 + $0x390] sm:$0xff]
                  %471 = vst [vmem:[%s349 + $0x1e0] sm:$0xff] %v470
                  %v472 = vld [vmem:[%s348 + $0x398] sm:$0xff]
                  %473 = vst [vmem:[%s349 + $0x1e8] sm:$0xff] %v472
                  %v474 = vld [vmem:[%s348 + $0x3a0] sm:$0xff]
                  %475 = vst [vmem:[%s349 + $0x1f0] sm:$0xff] %v474
                  %v476 = vld [vmem:[%s348 + $0x3a8] sm:$0xff]
                  %477 = vst [vmem:[%s349 + $0x1f8] sm:$0xff] %v476
                  %v478 = vld [vmem:[%s348 + $0x3b0] sm:$0xff]
                  %479 = vst [vmem:[%s349 + $0x200] sm:$0xff] %v478
                  %v480 = vld [vmem:[%s348 + $0x3b8] sm:$0xff]
                  %481 = vst [vmem:[%s349 + $0x208] sm:$0xff] %v480
                  %v482 = vld [vmem:[%s348 + $0x3c0] sm:$0xff]
                  %483 = vst [vmem:[%s349 + $0x210] sm:$0xff] %v482
                  %v484 = vld [vmem:[%s348 + $0x3c8] sm:$0xff]
                  %485 = vst [vmem:[%s349 + $0x218] sm:$0xff] %v484
                  %v486 = vld [vmem:[%s348 + $0x3d0] sm:$0xff]
                  %487 = vst [vmem:[%s349 + $0x220] sm:$0xff] %v486
                  %v488 = vld [vmem:[%s348 + $0x3d8] sm:$0xff]
                  %489 = vst [vmem:[%s349 + $0x228] sm:$0xff] %v488
                  %v490 = vld [vmem:[%s348 + $0x3e0] sm:$0xff]
                  %491 = vst [vmem:[%s349 + $0x230] sm:$0xff] %v490
                  %v492 = vld [vmem:[%s348 + $0x3e8] sm:$0xff]
                  %493 = vst [vmem:[%s349 + $0x238] sm:$0xff] %v492
                $region56: #{tpu_custom_call.1} parent=50 // loop_footer
                  %s347 = sadd.s32 1, %s343
                $region57: #{tpu_custom_call.1} parent=50 // loop_footer_branch
                  %342 = sbr.rel target = $region53
                $region58: #{tpu_custom_call.1} parent=50 // loop_exit
                  _
              $region51: #{tpu_custom_call.1} parent=35 // pred_fallthru
                _
              // Predicated region
              $region59: #{tpu_custom_call.1} parent=35 // pred_check
                _
              $region60: #{tpu_custom_call.1} parent=35 // pred_check_branch
                %495 = sbr.rel target = $region62
              $region61: #{tpu_custom_call.1} parent=35 // pred_region
                _
              $region62: #{tpu_custom_call.1} parent=35 // pred_fallthru
                _
            $region36: #{tpu_custom_call.1} parent=31 // pred_fallthru
              _
            // Predicated region
            $region37: #{tpu_custom_call.1} parent=31 // pred_check
              _
            $region38: #{tpu_custom_call.1} parent=31 // pred_check_branch
              %186 = sbr.rel target = $region40
            $region39: #{tpu_custom_call.1} parent=31 // pred_region
              loop: start=0, step=1, limit=1
              $region41: #{tpu_custom_call.1} parent=39 // loop_pre_header
                _
              $region42: #{tpu_custom_call.1} parent=39 // loop_header
                %s189 = sphi 0, %s193
                %p190 = scmp.ge.s32.totalorder %s189, 1
                %s194 = sphi %s180, %s180
                %s195 = sphi %s177, %s177
              $region43: #{tpu_custom_call.1} parent=39 // loop_header_branch
                %192 = sbr.rel (%p190) target = $region47
              $region44: #{tpu_custom_call.1} parent=39 // loop_body
                %v196 = vld [vmem:[%s194] sm:$0xff]
                %197 = vst [vmem:[%s195] sm:$0xff] %v196
                %v198 = vld [vmem:[%s194 + $0x8] sm:$0xff]
                %199 = vst [vmem:[%s195 + $0x8] sm:$0xff] %v198
                %v200 = vld [vmem:[%s194 + $0x10] sm:$0xff]
                %201 = vst [vmem:[%s195 + $0x10] sm:$0xff] %v200
                %v202 = vld [vmem:[%s194 + $0x18] sm:$0xff]
                %203 = vst [vmem:[%s195 + $0x18] sm:$0xff] %v202
                %v204 = vld [vmem:[%s194 + $0x20] sm:$0xff]
                %205 = vst [vmem:[%s195 + $0x20] sm:$0xff] %v204
                %v206 = vld [vmem:[%s194 + $0x28] sm:$0xff]
                %207 = vst [vmem:[%s195 + $0x28] sm:$0xff] %v206
                %v208 = vld [vmem:[%s194 + $0x30] sm:$0xff]
                %209 = vst [vmem:[%s195 + $0x30] sm:$0xff] %v208
                %v210 = vld [vmem:[%s194 + $0x38] sm:$0xff]
                %211 = vst [vmem:[%s195 + $0x38] sm:$0xff] %v210
                %v212 = vld [vmem:[%s194 + $0x40] sm:$0xff]
                %213 = vst [vmem:[%s195 + $0x40] sm:$0xff] %v212
                %v214 = vld [vmem:[%s194 + $0x48] sm:$0xff]
                %215 = vst [vmem:[%s195 + $0x48] sm:$0xff] %v214
                %v216 = vld [vmem:[%s194 + $0x50] sm:$0xff]
                %217 = vst [vmem:[%s195 + $0x50] sm:$0xff] %v216
                %v218 = vld [vmem:[%s194 + $0x58] sm:$0xff]
                %219 = vst [vmem:[%s195 + $0x58] sm:$0xff] %v218
                %v220 = vld [vmem:[%s194 + $0x60] sm:$0xff]
                %221 = vst [vmem:[%s195 + $0x60] sm:$0xff] %v220
                %v222 = vld [vmem:[%s194 + $0x68] sm:$0xff]
                %223 = vst [vmem:[%s195 + $0x68] sm:$0xff] %v222
                %v224 = vld [vmem:[%s194 + $0x70] sm:$0xff]
                %225 = vst [vmem:[%s195 + $0x70] sm:$0xff] %v224
                %v226 = vld [vmem:[%s194 + $0x78] sm:$0xff]
                %227 = vst [vmem:[%s195 + $0x78] sm:$0xff] %v226
                %v228 = vld [vmem:[%s194 + $0x80] sm:$0xff]
                %229 = vst [vmem:[%s195 + $0x80] sm:$0xff] %v228
                %v230 = vld [vmem:[%s194 + $0x88] sm:$0xff]
                %231 = vst [vmem:[%s195 + $0x88] sm:$0xff] %v230
                %v232 = vld [vmem:[%s194 + $0x120] sm:$0xff]
                %233 = vst [vmem:[%s195 + $0x90] sm:$0xff] %v232
                %v234 = vld [vmem:[%s194 + $0x128] sm:$0xff]
                %235 = vst [vmem:[%s195 + $0x98] sm:$0xff] %v234
                %v236 = vld [vmem:[%s194 + $0x130] sm:$0xff]
                %237 = vst [vmem:[%s195 + $0xa0] sm:$0xff] %v236
                %v238 = vld [vmem:[%s194 + $0x138] sm:$0xff]
                %239 = vst [vmem:[%s195 + $0xa8] sm:$0xff] %v238
                %v240 = vld [vmem:[%s194 + $0x140] sm:$0xff]
                %241 = vst [vmem:[%s195 + $0xb0] sm:$0xff] %v240
                %v242 = vld [vmem:[%s194 + $0x148] sm:$0xff]
                %243 = vst [vmem:[%s195 + $0xb8] sm:$0xff] %v242
                %v244 = vld [vmem:[%s194 + $0x150] sm:$0xff]
                %245 = vst [vmem:[%s195 + $0xc0] sm:$0xff] %v244
                %v246 = vld [vmem:[%s194 + $0x158] sm:$0xff]
                %247 = vst [vmem:[%s195 + $0xc8] sm:$0xff] %v246
                %v248 = vld [vmem:[%s194 + $0x160] sm:$0xff]
                %249 = vst [vmem:[%s195 + $0xd0] sm:$0xff] %v248
                %v250 = vld [vmem:[%s194 + $0x168] sm:$0xff]
                %251 = vst [vmem:[%s195 + $0xd8] sm:$0xff] %v250
                %v252 = vld [vmem:[%s194 + $0x170] sm:$0xff]
                %253 = vst [vmem:[%s195 + $0xe0] sm:$0xff] %v252
                %v254 = vld [vmem:[%s194 + $0x178] sm:$0xff]
                %255 = vst [vmem:[%s195 + $0xe8] sm:$0xff] %v254
                %v256 = vld [vmem:[%s194 + $0x180] sm:$0xff]
                %257 = vst [vmem:[%s195 + $0xf0] sm:$0xff] %v256
                %v258 = vld [vmem:[%s194 + $0x188] sm:$0xff]
                %259 = vst [vmem:[%s195 + $0xf8] sm:$0xff] %v258
                %v260 = vld [vmem:[%s194 + $0x190] sm:$0xff]
                %261 = vst [vmem:[%s195 + $0x100] sm:$0xff] %v260
                %v262 = vld [vmem:[%s194 + $0x198] sm:$0xff]
                %263 = vst [vmem:[%s195 + $0x108] sm:$0xff] %v262
                %v264 = vld [vmem:[%s194 + $0x1a0] sm:$0xff]
                %265 = vst [vmem:[%s195 + $0x110] sm:$0xff] %v264
                %v266 = vld [vmem:[%s194 + $0x1a8] sm:$0xff]
                %267 = vst [vmem:[%s195 + $0x118] sm:$0xff] %v266
                %v268 = vld [vmem:[%s194 + $0x240] sm:$0xff]
                %269 = vst [vmem:[%s195 + $0x120] sm:$0xff] %v268
                %v270 = vld [vmem:[%s194 + $0x248] sm:$0xff]
                %271 = vst [vmem:[%s195 + $0x128] sm:$0xff] %v270
                %v272 = vld [vmem:[%s194 + $0x250] sm:$0xff]
                %273 = vst [vmem:[%s195 + $0x130] sm:$0xff] %v272
                %v274 = vld [vmem:[%s194 + $0x258] sm:$0xff]
                %275 = vst [vmem:[%s195 + $0x138] sm:$0xff] %v274
                %v276 = vld [vmem:[%s194 + $0x260] sm:$0xff]
                %277 = vst [vmem:[%s195 + $0x140] sm:$0xff] %v276
                %v278 = vld [vmem:[%s194 + $0x268] sm:$0xff]
                %279 = vst [vmem:[%s195 + $0x148] sm:$0xff] %v278
                %v280 = vld [vmem:[%s194 + $0x270] sm:$0xff]
                %281 = vst [vmem:[%s195 + $0x150] sm:$0xff] %v280
                %v282 = vld [vmem:[%s194 + $0x278] sm:$0xff]
                %283 = vst [vmem:[%s195 + $0x158] sm:$0xff] %v282
                %v284 = vld [vmem:[%s194 + $0x280] sm:$0xff]
                %285 = vst [vmem:[%s195 + $0x160] sm:$0xff] %v284
                %v286 = vld [vmem:[%s194 + $0x288] sm:$0xff]
                %287 = vst [vmem:[%s195 + $0x168] sm:$0xff] %v286
                %v288 = vld [vmem:[%s194 + $0x290] sm:$0xff]
                %289 = vst [vmem:[%s195 + $0x170] sm:$0xff] %v288
                %v290 = vld [vmem:[%s194 + $0x298] sm:$0xff]
                %291 = vst [vmem:[%s195 + $0x178] sm:$0xff] %v290
                %v292 = vld [vmem:[%s194 + $0x2a0] sm:$0xff]
                %293 = vst [vmem:[%s195 + $0x180] sm:$0xff] %v292
                %v294 = vld [vmem:[%s194 + $0x2a8] sm:$0xff]
                %295 = vst [vmem:[%s195 + $0x188] sm:$0xff] %v294
                %v296 = vld [vmem:[%s194 + $0x2b0] sm:$0xff]
                %297 = vst [vmem:[%s195 + $0x190] sm:$0xff] %v296
                %v298 = vld [vmem:[%s194 + $0x2b8] sm:$0xff]
                %299 = vst [vmem:[%s195 + $0x198] sm:$0xff] %v298
                %v300 = vld [vmem:[%s194 + $0x2c0] sm:$0xff]
                %301 = vst [vmem:[%s195 + $0x1a0] sm:$0xff] %v300
                %v302 = vld [vmem:[%s194 + $0x2c8] sm:$0xff]
                %303 = vst [vmem:[%s195 + $0x1a8] sm:$0xff] %v302
                %v304 = vld [vmem:[%s194 + $0x360] sm:$0xff]
                %305 = vst [vmem:[%s195 + $0x1b0] sm:$0xff] %v304
                %v306 = vld [vmem:[%s194 + $0x368] sm:$0xff]
                %307 = vst [vmem:[%s195 + $0x1b8] sm:$0xff] %v306
                %v308 = vld [vmem:[%s194 + $0x370] sm:$0xff]
                %309 = vst [vmem:[%s195 + $0x1c0] sm:$0xff] %v308
                %v310 = vld [vmem:[%s194 + $0x378] sm:$0xff]
                %311 = vst [vmem:[%s195 + $0x1c8] sm:$0xff] %v310
                %v312 = vld [vmem:[%s194 + $0x380] sm:$0xff]
                %313 = vst [vmem:[%s195 + $0x1d0] sm:$0xff] %v312
                %v314 = vld [vmem:[%s194 + $0x388] sm:$0xff]
                %315 = vst [vmem:[%s195 + $0x1d8] sm:$0xff] %v314
                %v316 = vld [vmem:[%s194 + $0x390] sm:$0xff]
                %317 = vst [vmem:[%s195 + $0x1e0] sm:$0xff] %v316
                %v318 = vld [vmem:[%s194 + $0x398] sm:$0xff]
                %319 = vst [vmem:[%s195 + $0x1e8] sm:$0xff] %v318
                %v320 = vld [vmem:[%s194 + $0x3a0] sm:$0xff]
                %321 = vst [vmem:[%s195 + $0x1f0] sm:$0xff] %v320
                %v322 = vld [vmem:[%s194 + $0x3a8] sm:$0xff]
                %323 = vst [vmem:[%s195 + $0x1f8] sm:$0xff] %v322
                %v324 = vld [vmem:[%s194 + $0x3b0] sm:$0xff]
                %325 = vst [vmem:[%s195 + $0x200] sm:$0xff] %v324
                %v326 = vld [vmem:[%s194 + $0x3b8] sm:$0xff]
                %327 = vst [vmem:[%s195 + $0x208] sm:$0xff] %v326
                %v328 = vld [vmem:[%s194 + $0x3c0] sm:$0xff]
                %329 = vst [vmem:[%s195 + $0x210] sm:$0xff] %v328
                %v330 = vld [vmem:[%s194 + $0x3c8] sm:$0xff]
                %331 = vst [vmem:[%s195 + $0x218] sm:$0xff] %v330
                %v332 = vld [vmem:[%s194 + $0x3d0] sm:$0xff]
                %333 = vst [vmem:[%s195 + $0x220] sm:$0xff] %v332
                %v334 = vld [vmem:[%s194 + $0x3d8] sm:$0xff]
                %335 = vst [vmem:[%s195 + $0x228] sm:$0xff] %v334
                %v336 = vld [vmem:[%s194 + $0x3e0] sm:$0xff]
                %337 = vst [vmem:[%s195 + $0x230] sm:$0xff] %v336
                %v338 = vld [vmem:[%s194 + $0x3e8] sm:$0xff]
                %339 = vst [vmem:[%s195 + $0x238] sm:$0xff] %v338
              $region45: #{tpu_custom_call.1} parent=39 // loop_footer
                %s193 = sadd.s32 1, %s189
              $region46: #{tpu_custom_call.1} parent=39 // loop_footer_branch
                %188 = sbr.rel target = $region42
              $region47: #{tpu_custom_call.1} parent=39 // loop_exit
                _
            $region40: #{tpu_custom_call.1} parent=31 // pred_fallthru
              _
          $region32: #{tpu_custom_call.1} parent=27 // pred_fallthru
            _
          %496 = vnop
        $region28: #{tpu_custom_call.1} parent=23 // pred_fallthru
          _
      $region24: #{tpu_custom_call.1} parent=5 // pred_fallthru
        _
      %p497 = scmp.le.s32.totalorder 1, %s12
      %p498 = scmp.lt.s32.totalorder %s12, 3
      %p499 = pnand %p497, %p498
      %p500 = pneg %p499
      // Predicated region
      $region63: #{tpu_custom_call.1} parent=5 // pred_check
        _
      $region64: #{tpu_custom_call.1} parent=5 // pred_check_branch
        %502 = sbr.rel (%p499) target = $region66
      $region65: #{tpu_custom_call.1} parent=5 // pred_region
        %s503 = ssub.s32 %s12, 1
        %s504 = sand.u32 %s44, 1
        %s505 = sand.u32 %s44, 1
        %s506 = smul.addr %s505, 576
        %s507 = scalar_lea.vmem [#allocation2], %s506
        // Predicated region
        $region67: #{tpu_custom_call.1} parent=65 // pred_check
          %p508 = pneg %p57
        $region68: #{tpu_custom_call.1} parent=65 // pred_check_branch
          %510 = sbr.rel (%p508) target = $region70
        $region69: #{tpu_custom_call.1} parent=65 // pred_region
          _
        $region70: #{tpu_custom_call.1} parent=65 // pred_fallthru
          _
        %s511 = sand.u32 %s44, 1
        %s512 = sand.u32 %s44, 1
        %s513 = smul.addr %s512, 576
        %s514 = scalar_lea.vmem [#allocation2], %s513
        %p515 = pneg %p57
        %p516 = pneg %p54
        %p517 = scmp.lt.s32.totalorder %s23, 0
        %s518 = scalar_select %p517, %s23, 0
        %s519 = smul.addr %s518, 4
        %s520 = scalar_lea.vmem %s1, %s519
        %p521 = pneg %p83
        %p522 = pneg %p80
        %p523 = scmp.lt.s32.totalorder %s23, 0
        %s524 = scalar_select %p523, %s23, 0
        %s525 = scalar_lea.vmem %s2, %s524
        %p526 = pneg %p109
        %p527 = pneg %p106
        %p528 = pneg %p139
        %p529 = pneg %p136
        %s530 = sand.u32 %s126, 1
        %s531 = scalar_lea.sflag [#allocation4], %s530
        %s532 = sand.u32 %s126, 1
        %s533 = smul.addr %s532, 64
        %s534 = scalar_lea.vmem [#allocation3], %s533
        %p535 = scmp.lt.s32.totalorder %s23, 0
        %s536 = scalar_select %p535, %s23, 0
        %s537 = smul.addr %s536, 4
        %s538 = scalar_lea.vmem %s1, %s537
        %p539 = scmp.lt.s32.totalorder %s23, 0
        %s540 = scalar_select %p539, %s23, 0
        %s541 = scalar_lea.vmem %s2, %s540
        %s542 = smul.u32 8, %s24
        %s543 = smul.u32 %s24, 8
        %s544 = smul.u32 %s543, 16
        %s545 = scalar_lea.vmem %s507, %s544 [#allocation2]
        %v546 = vld [vmem:[%s545] sm:$0xff]
        %v547 = vld [vmem:[%s545 + $0x10] sm:$0xff]
        %v548 = vld [vmem:[%s545 + $0x20] sm:$0xff]
        %v549 = vld [vmem:[%s545 + $0x30] sm:$0xff]
        %v550 = vld [vmem:[%s545 + $0x40] sm:$0xff]
        %v551 = vld [vmem:[%s545 + $0x50] sm:$0xff]
        %v552 = vld [vmem:[%s545 + $0x60] sm:$0xff]
        %v553 = vld [vmem:[%s545 + $0x70] sm:$0xff]
        %v554 = vld [vmem:[%s538] sm:$0xf]
        %s555 = sadd.s32 %s544, 144
        %s556 = scalar_lea.vmem %s507, %s555 [#allocation2]
        %v557 = vld [vmem:[%s556] sm:$0xff]
        %v558 = vld [vmem:[%s556 + $0x10] sm:$0xff]
        %v559 = vld [vmem:[%s556 + $0x20] sm:$0xff]
        %v560 = vld [vmem:[%s556 + $0x30] sm:$0xff]
        %v561 = vld [vmem:[%s556 + $0x40] sm:$0xff]
        %v562 = vld [vmem:[%s556 + $0x50] sm:$0xff]
        %v563 = vld [vmem:[%s556 + $0x60] sm:$0xff]
        %v564 = vld [vmem:[%s556 + $0x70] sm:$0xff]
        %s565 = scalar_lea.vmem %s538, 4
        %v566 = vld [vmem:[%s565] sm:$0xf]
        %vm567 = vcmask 31744
        %v569 = vsel %vm567, %v557, 0
        %v572 = vsel %vm567, %v558, 0
        %v575 = vsel %vm567, %v559, 0
        %v578 = vsel %vm567, %v560, 0
        %v581 = vsel %vm567, %v561, 0
        %v584 = vsel %vm567, %v562, 0
        %v587 = vsel %vm567, %v563, 0
        %v590 = vsel %vm567, %v564, 0
        %vm592 = vcmask 1043456
        %v594 = vsel %vm592, %v566, 0
        %596 = vmatprep.subr.mxu0 0.0
        %597 = vmatpush1.msra.mxu0 %v594
        %598 = vmatprep.subr.mxu0 0.0
        %599 = vmatpush1.msra.mxu0 0.0
        %600 = vmatprep.subr.mxu0 0.0
        %601 = vmatpush1.msra.mxu0 0.0
        %602 = vmatprep.subr.mxu0 0.0
        %603 = vmatpush1.msra.mxu0 0.0
        %604 = vmatprep.subr.mxu0 0.0
        %605 = vmatpush1.msra.mxu0 0.0
        %606 = vmatprep.subr.mxu0 0.0
        %607 = vmatpush1.msra.mxu0 0.0
        %608 = vmatprep.subr.mxu0 0.0
        %609 = vmatpush1.msra.mxu0 0.0
        %610 = vmatprep.subr.mxu0 0.0
        %611 = vmatpush1.msra.mxu0 0.0
        %612 = vmatprep.subr.mxu0 0.0
        %613 = vmatpush1.msra.mxu0 0.0
        %614 = vmatprep.subr.mxu0 0.0
        %615 = vmatpush1.msra.mxu0 0.0
        %616 = vmatprep.subr.mxu0 0.0
        %617 = vmatpush1.msra.mxu0 0.0
        %618 = vmatprep.subr.mxu0 0.0
        %619 = vmatpush1.msra.mxu0 0.0
        %620 = vmatprep.subr.mxu0 0.0
        %621 = vmatpush1.msra.mxu0 0.0
        %622 = vmatprep.subr.mxu0 0.0
        %623 = vmatpush1.msra.mxu0 0.0
        %624 = vmatprep.subr.mxu0 0.0
        %625 = vmatpush1.msra.mxu0 0.0
        %626 = vmatprep.subr.mxu0 0.0
        %627 = vmatpush1.msra.mxu0 0.0
        %628 = vmatprep.subr.mxu0 0.0
        %629 = vmatpush1.msra.mxu0 0.0
        %630 = vmatprep.subr.mxu0 0.0
        %631 = vmatpush1.msra.mxu0 0.0
        %632 = vmatprep.subr.mxu0 0.0
        %633 = vmatpush1.msra.mxu0 0.0
        %634 = vmatprep.subr.mxu0 0.0
        %635 = vmatpush1.msra.mxu0 0.0
        %636 = vmatprep.subr.mxu0 0.0
        %637 = vmatpush1.msra.mxu0 0.0
        %638 = vmatprep.subr.mxu0 0.0
        %639 = vmatpush1.msra.mxu0 0.0
        %640 = vmatprep.subr.mxu0 0.0
        %641 = vmatpush1.msra.mxu0 0.0
        %642 = vmatprep.subr.mxu0 0.0
        %643 = vmatpush1.msra.mxu0 0.0
        %644 = vmatprep.subr.mxu0 0.0
        %645 = vmatpush1.msra.mxu0 0.0
        %646 = vmatprep.subr.mxu0 0.0
        %647 = vmatpush1.msra.mxu0 0.0
        %648 = vmatprep.subr.mxu0 0.0
        %649 = vmatpush1.msra.mxu0 0.0
        %650 = vmatprep.subr.mxu0 0.0
        %651 = vmatpush1.msra.mxu0 0.0
        %652 = vmatprep.subr.mxu0 0.0
        %653 = vmatpush1.msra.mxu0 0.0
        %654 = vmatprep.subr.mxu0 0.0
        %655 = vmatpush1.msra.mxu0 0.0
        %656 = vmatprep.subr.mxu0 0.0
        %657 = vmatpush1.msra.mxu0 0.0
        %658 = vmatprep.subr.mxu0 0.0
        %659 = vmatpush1.msra.mxu0 0.0
        %660 = vmatprep.mubr.f32.mxu0 0.0
        %661 = vmatmul.mubr.f32.gmra.mrb[0].mxu0 %v569
        %v662 = vpop.f32.mrb[0].mxu0
        %v663 = vadd.f32 0.0, %v662
        %v664 = vpop.f32.mrb[0].mxu0
        %665 = vmatprep.mubr.f32.mxu0 0.0
        %666 = vmatmul.mubr.f32.gmra.mrb[0].mxu0 %v572
        %v667 = vpop.f32.mrb[0].mxu0
        %v668 = vadd.f32 0.0, %v667
        %v669 = vpop.f32.mrb[0].mxu0
        %670 = vmatprep.mubr.f32.mxu0 0.0
        %671 = vmatmul.mubr.f32.gmra.mrb[0].mxu0 %v575
        %v672 = vpop.f32.mrb[0].mxu0
        %v673 = vadd.f32 0.0, %v672
        %v674 = vpop.f32.mrb[0].mxu0
        %675 = vmatprep.mubr.f32.mxu0 0.0
        %676 = vmatmul.mubr.f32.gmra.mrb[0].mxu0 %v578
        %v677 = vpop.f32.mrb[0].mxu0
        %v678 = vadd.f32 0.0, %v677
        %v679 = vpop.f32.mrb[0].mxu0
        %680 = vmatprep.mubr.f32.mxu0 0.0
        %681 = vmatmul.mubr.f32.gmra.mrb[0].mxu0 %v581
        %v682 = vpop.f32.mrb[0].mxu0
        %v683 = vadd.f32 0.0, %v682
        %v684 = vpop.f32.mrb[0].mxu0
        %685 = vmatprep.mubr.f32.mxu0 0.0
        %686 = vmatmul.mubr.f32.gmra.mrb[0].mxu0 %v584
        %v687 = vpop.f32.mrb[0].mxu0
        %v688 = vadd.f32 0.0, %v687
        %v689 = vpop.f32.mrb[0].mxu0
        %690 = vmatprep.mubr.f32.mxu0 0.0
        %691 = vmatmul.mubr.f32.gmra.mrb[0].mxu0 %v587
        %v692 = vpop.f32.mrb[0].mxu0
        %v693 = vadd.f32 0.0, %v692
        %v694 = vpop.f32.mrb[0].mxu0
        %695 = vmatprep.mubr.f32.mxu0 0.0
        %696 = vmatmul.mubr.f32.gmra.mrb[0].mxu0 %v590
        %v697 = vpop.f32.mrb[0].mxu0
        %v698 = vadd.f32 0.0, %v697
        %v699 = vpop.f32.mrb[0].mxu0
        %700 = vdwg.mxu0
        %v702 = vsel %vm567, %v546, 0
        %v705 = vsel %vm567, %v547, 0
        %v708 = vsel %vm567, %v548, 0
        %v711 = vsel %vm567, %v549, 0
        %v714 = vsel %vm567, %v550, 0
        %v717 = vsel %vm567, %v551, 0
        %v720 = vsel %vm567, %v552, 0
        %v723 = vsel %vm567, %v553, 0
        %v726 = vsel %vm592, %v554, 0
        %728 = vmatprep.subr.mxu0 0.0
        %729 = vmatpush1.msra.mxu0 %v726
        %730 = vmatprep.subr.mxu0 0.0
        %731 = vmatpush1.msra.mxu0 0.0
        %732 = vmatprep.subr.mxu0 0.0
        %733 = vmatpush1.msra.mxu0 0.0
        %734 = vmatprep.subr.mxu0 0.0
        %735 = vmatpush1.msra.mxu0 0.0
        %736 = vmatprep.subr.mxu0 0.0
        %737 = vmatpush1.msra.mxu0 0.0
        %738 = vmatprep.subr.mxu0 0.0
        %739 = vmatpush1.msra.mxu0 0.0
        %740 = vmatprep.subr.mxu0 0.0
        %741 = vmatpush1.msra.mxu0 0.0
        %742 = vmatprep.subr.mxu0 0.0
        %743 = vmatpush1.msra.mxu0 0.0
        %744 = vmatprep.subr.mxu0 0.0
        %745 = vmatpush1.msra.mxu0 0.0
        %746 = vmatprep.subr.mxu0 0.0
        %747 = vmatpush1.msra.mxu0 0.0
        %748 = vmatprep.subr.mxu0 0.0
        %749 = vmatpush1.msra.mxu0 0.0
        %750 = vmatprep.subr.mxu0 0.0
        %751 = vmatpush1.msra.mxu0 0.0
        %752 = vmatprep.subr.mxu0 0.0
        %753 = vmatpush1.msra.mxu0 0.0
        %754 = vmatprep.subr.mxu0 0.0
        %755 = vmatpush1.msra.mxu0 0.0
        %756 = vmatprep.subr.mxu0 0.0
        %757 = vmatpush1.msra.mxu0 0.0
        %758 = vmatprep.subr.mxu0 0.0
        %759 = vmatpush1.msra.mxu0 0.0
        %760 = vmatprep.subr.mxu0 0.0
        %761 = vmatpush1.msra.mxu0 0.0
        %762 = vmatprep.subr.mxu0 0.0
        %763 = vmatpush1.msra.mxu0 0.0
        %764 = vmatprep.subr.mxu0 0.0
        %765 = vmatpush1.msra.mxu0 0.0
        %766 = vmatprep.subr.mxu0 0.0
        %767 = vmatpush1.msra.mxu0 0.0
        %768 = vmatprep.subr.mxu0 0.0
        %769 = vmatpush1.msra.mxu0 0.0
        %770 = vmatprep.subr.mxu0 0.0
        %771 = vmatpush1.msra.mxu0 0.0
        %772 = vmatprep.subr.mxu0 0.0
        %773 = vmatpush1.msra.mxu0 0.0
        %774 = vmatprep.subr.mxu0 0.0
        %775 = vmatpush1.msra.mxu0 0.0
        %776 = vmatprep.subr.mxu0 0.0
        %777 = vmatpush1.msra.mxu0 0.0
        %778 = vmatprep.subr.mxu0 0.0
        %779 = vmatpush1.msra.mxu0 0.0
        %780 = vmatprep.subr.mxu0 0.0
        %781 = vmatpush1.msra.mxu0 0.0
        %782 = vmatprep.subr.mxu0 0.0
        %783 = vmatpush1.msra.mxu0 0.0
        %784 = vmatprep.subr.mxu0 0.0
        %785 = vmatpush1.msra.mxu0 0.0
        %786 = vmatprep.subr.mxu0 0.0
        %787 = vmatpush1.msra.mxu0 0.0
        %788 = vmatprep.subr.mxu0 0.0
        %789 = vmatpush1.msra.mxu0 0.0
        %790 = vmatprep.subr.mxu0 0.0
        %791 = vmatpush1.msra.mxu0 0.0
        %792 = vmatprep.mubr.f32.mxu0 0.0
        %793 = vmatmul.mubr.f32.gmra.mrb[0].mxu0 %v702
        %v794 = vpop.f32.mrb[0].mxu0
        %v795 = vadd.f32 %v663, %v794
        %v796 = vpop.f32.mrb[0].mxu0
        %797 = vmatprep.mubr.f32.mxu0 0.0
        %798 = vmatmul.mubr.f32.gmra.mrb[0].mxu0 %v705
        %v799 = vpop.f32.mrb[0].mxu0
        %v800 = vadd.f32 %v668, %v799
        %v801 = vpop.f32.mrb[0].mxu0
        %802 = vmatprep.mubr.f32.mxu0 0.0
        %803 = vmatmul.mubr.f32.gmra.mrb[0].mxu0 %v708
        %v804 = vpop.f32.mrb[0].mxu0
        %v805 = vadd.f32 %v673, %v804
        %v806 = vpop.f32.mrb[0].mxu0
        %807 = vmatprep.mubr.f32.mxu0 0.0
        %808 = vmatmul.mubr.f32.gmra.mrb[0].mxu0 %v711
        %v809 = vpop.f32.mrb[0].mxu0
        %v810 = vadd.f32 %v678, %v809
        %v811 = vpop.f32.mrb[0].mxu0
        %812 = vmatprep.mubr.f32.mxu0 0.0
        %813 = vmatmul.mubr.f32.gmra.mrb[0].mxu0 %v714
        %v814 = vpop.f32.mrb[0].mxu0
        %v815 = vadd.f32 %v683, %v814
        %v816 = vpop.f32.mrb[0].mxu0
        %817 = vmatprep.mubr.f32.mxu0 0.0
        %818 = vmatmul.mubr.f32.gmra.mrb[0].mxu0 %v717
        %v819 = vpop.f32.mrb[0].mxu0
        %v820 = vadd.f32 %v688, %v819
        %v821 = vpop.f32.mrb[0].mxu0
        %822 = vmatprep.mubr.f32.mxu0 0.0
        %823 = vmatmul.mubr.f32.gmra.mrb[0].mxu0 %v720
        %v824 = vpop.f32.mrb[0].mxu0
        %v825 = vadd.f32 %v693, %v824
        %v826 = vpop.f32.mrb[0].mxu0
        %827 = vmatprep.mubr.f32.mxu0 0.0
        %828 = vmatmul.mubr.f32.gmra.mrb[0].mxu0 %v723
        %v829 = vpop.f32.mrb[0].mxu0
        %v830 = vadd.f32 %v698, %v829
        %v831 = vpop.f32.mrb[0].mxu0
        %832 = vdwg.mxu0
        %v833 = vld [vmem:[%s545 + $0x1] sm:$0xff]
        %v834 = vld [vmem:[%s545 + $0x11] sm:$0xff]
        %v835 = vld [vmem:[%s545 + $0x21] sm:$0xff]
        %v836 = vld [vmem:[%s545 + $0x31] sm:$0xff]
        %v837 = vld [vmem:[%s545 + $0x41] sm:$0xff]
        %v838 = vld [vmem:[%s545 + $0x51] sm:$0xff]
        %v839 = vld [vmem:[%s545 + $0x61] sm:$0xff]
        %v840 = vld [vmem:[%s545 + $0x71] sm:$0xff]
        %s841 = scalar_lea.vmem %s538, 8
        %v842 = vld [vmem:[%s841] sm:$0xf]
        %v844 = vsel %vm567, %v833, 0
        %v847 = vsel %vm567, %v834, 0
        %v850 = vsel %vm567, %v835, 0
        %v853 = vsel %vm567, %v836, 0
        %v856 = vsel %vm567, %v837, 0
        %v859 = vsel %vm567, %v838, 0
        %v862 = vsel %vm567, %v839, 0
        %v865 = vsel %vm567, %v840, 0
        %v868 = vsel %vm592, %v842, 0
        %870 = vmatprep.subr.mxu0 0.0
        %871 = vmatpush1.msra.mxu0 %v868
        %872 = vmatprep.subr.mxu0 0.0
        %873 = vmatpush1.msra.mxu0 0.0
        %874 = vmatprep.subr.mxu0 0.0
        %875 = vmatpush1.msra.mxu0 0.0
        %876 = vmatprep.subr.mxu0 0.0
        %877 = vmatpush1.msra.mxu0 0.0
        %878 = vmatprep.subr.mxu0 0.0
        %879 = vmatpush1.msra.mxu0 0.0
        %880 = vmatprep.subr.mxu0 0.0
        %881 = vmatpush1.msra.mxu0 0.0
        %882 = vmatprep.subr.mxu0 0.0
        %883 = vmatpush1.msra.mxu0 0.0
        %884 = vmatprep.subr.mxu0 0.0
        %885 = vmatpush1.msra.mxu0 0.0
        %886 = vmatprep.subr.mxu0 0.0
        %887 = vmatpush1.msra.mxu0 0.0
        %888 = vmatprep.subr.mxu0 0.0
        %889 = vmatpush1.msra.mxu0 0.0
        %890 = vmatprep.subr.mxu0 0.0
        %891 = vmatpush1.msra.mxu0 0.0
        %892 = vmatprep.subr.mxu0 0.0
        %893 = vmatpush1.msra.mxu0 0.0
        %894 = vmatprep.subr.mxu0 0.0
        %895 = vmatpush1.msra.mxu0 0.0
        %896 = vmatprep.subr.mxu0 0.0
        %897 = vmatpush1.msra.mxu0 0.0
        %898 = vmatprep.subr.mxu0 0.0
        %899 = vmatpush1.msra.mxu0 0.0
        %900 = vmatprep.subr.mxu0 0.0
        %901 = vmatpush1.msra.mxu0 0.0
        %902 = vmatprep.subr.mxu0 0.0
        %903 = vmatpush1.msra.mxu0 0.0
        %904 = vmatprep.subr.mxu0 0.0
        %905 = vmatpush1.msra.mxu0 0.0
        %906 = vmatprep.subr.mxu0 0.0
        %907 = vmatpush1.msra.mxu0 0.0
        %908 = vmatprep.subr.mxu0 0.0
        %909 = vmatpush1.msra.mxu0 0.0
        %910 = vmatprep.subr.mxu0 0.0
        %911 = vmatpush1.msra.mxu0 0.0
        %912 = vmatprep.subr.mxu0 0.0
        %913 = vmatpush1.msra.mxu0 0.0
        %914 = vmatprep.subr.mxu0 0.0
        %915 = vmatpush1.msra.mxu0 0.0
        %916 = vmatprep.subr.mxu0 0.0
        %917 = vmatpush1.msra.mxu0 0.0
        %918 = vmatprep.subr.mxu0 0.0
        %919 = vmatpush1.msra.mxu0 0.0
        %920 = vmatprep.subr.mxu0 0.0
        %921 = vmatpush1.msra.mxu0 0.0
        %922 = vmatprep.subr.mxu0 0.0
        %923 = vmatpush1.msra.mxu0 0.0
        %924 = vmatprep.subr.mxu0 0.0
        %925 = vmatpush1.msra.mxu0 0.0
        %926 = vmatprep.subr.mxu0 0.0
        %927 = vmatpush1.msra.mxu0 0.0
        %928 = vmatprep.subr.mxu0 0.0
        %929 = vmatpush1.msra.mxu0 0.0
        %930 = vmatprep.subr.mxu0 0.0
        %931 = vmatpush1.msra.mxu0 0.0
        %932 = vmatprep.subr.mxu0 0.0
        %933 = vmatpush1.msra.mxu0 0.0
        %934 = vmatprep.mubr.f32.mxu0 0.0
        %935 = vmatmul.mubr.f32.gmra.mrb[0].mxu0 %v844
        %v936 = vpop.f32.mrb[0].mxu0
        %v937 = vadd.f32 0.0, %v936
        %v938 = vpop.f32.mrb[0].mxu0
        %939 = vmatprep.mubr.f32.mxu0 0.0
        %940 = vmatmul.mubr.f32.gmra.mrb[0].mxu0 %v847
        %v941 = vpop.f32.mrb[0].mxu0
        %v942 = vadd.f32 0.0, %v941
        %v943 = vpop.f32.mrb[0].mxu0
        %944 = vmatprep.mubr.f32.mxu0 0.0
        %945 = vmatmul.mubr.f32.gmra.mrb[0].mxu0 %v850
        %v946 = vpop.f32.mrb[0].mxu0
        %v947 = vadd.f32 0.0, %v946
        %v948 = vpop.f32.mrb[0].mxu0
        %949 = vmatprep.mubr.f32.mxu0 0.0
        %950 = vmatmul.mubr.f32.gmra.mrb[0].mxu0 %v853
        %v951 = vpop.f32.mrb[0].mxu0
        %v952 = vadd.f32 0.0, %v951
        %v953 = vpop.f32.mrb[0].mxu0
        %954 = vmatprep.mubr.f32.mxu0 0.0
        %955 = vmatmul.mubr.f32.gmra.mrb[0].mxu0 %v856
        %v956 = vpop.f32.mrb[0].mxu0
        %v957 = vadd.f32 0.0, %v956
        %v958 = vpop.f32.mrb[0].mxu0
        %959 = vmatprep.mubr.f32.mxu0 0.0
        %960 = vmatmul.mubr.f32.gmra.mrb[0].mxu0 %v859
        %v961 = vpop.f32.mrb[0].mxu0
        %v962 = vadd.f32 0.0, %v961
        %v963 = vpop.f32.mrb[0].mxu0
        %964 = vmatprep.mubr.f32.mxu0 0.0
        %965 = vmatmul.mubr.f32.gmra.mrb[0].mxu0 %v862
        %v966 = vpop.f32.mrb[0].mxu0
        %v967 = vadd.f32 0.0, %v966
        %v968 = vpop.f32.mrb[0].mxu0
        %969 = vmatprep.mubr.f32.mxu0 0.0
        %970 = vmatmul.mubr.f32.gmra.mrb[0].mxu0 %v865
        %v971 = vpop.f32.mrb[0].mxu0
        %v972 = vadd.f32 0.0, %v971
        %v973 = vpop.f32.mrb[0].mxu0
        %974 = vdwg.mxu0
        %v975 = vadd.f32 %v795, %v937
        %v976 = vadd.f32 %v800, %v942
        %v977 = vadd.f32 %v805, %v947
        %v978 = vadd.f32 %v810, %v952
        %v979 = vadd.f32 %v815, %v957
        %v980 = vadd.f32 %v820, %v962
        %v981 = vadd.f32 %v825, %v967
        %v982 = vadd.f32 %v830, %v972
        %s983 = sadd.s32 %s544, 288
        %s984 = scalar_lea.vmem %s507, %s983 [#allocation2]
        %v985 = vld [vmem:[%s984] sm:$0xff]
        %v986 = vld [vmem:[%s984 + $0x10] sm:$0xff]
        %v987 = vld [vmem:[%s984 + $0x20] sm:$0xff]
        %v988 = vld [vmem:[%s984 + $0x30] sm:$0xff]
        %v989 = vld [vmem:[%s984 + $0x40] sm:$0xff]
        %v990 = vld [vmem:[%s984 + $0x50] sm:$0xff]
        %v991 = vld [vmem:[%s984 + $0x60] sm:$0xff]
        %v992 = vld [vmem:[%s984 + $0x70] sm:$0xff]
        %s993 = scalar_lea.vmem %s538, 12
        %v994 = vld [vmem:[%s993] sm:$0xf]
        %v996 = vsel %vm567, %v985, 0
        %v999 = vsel %vm567, %v986, 0
        %v1002 = vsel %vm567, %v987, 0
        %v1005 = vsel %vm567, %v988, 0
        %v1008 = vsel %vm567, %v989, 0
        %v1011 = vsel %vm567, %v990, 0
        %v1014 = vsel %vm567, %v991, 0
        %v1017 = vsel %vm567, %v992, 0
        %v1020 = vsel %vm592, %v994, 0
        %1022 = vmatprep.subr.mxu0 0.0
        %1023 = vmatpush1.msra.mxu0 %v1020
        %1024 = vmatprep.subr.mxu0 0.0
        %1025 = vmatpush1.msra.mxu0 0.0
        %1026 = vmatprep.subr.mxu0 0.0
        %1027 = vmatpush1.msra.mxu0 0.0
        %1028 = vmatprep.subr.mxu0 0.0
        %1029 = vmatpush1.msra.mxu0 0.0
        %1030 = vmatprep.subr.mxu0 0.0
        %1031 = vmatpush1.msra.mxu0 0.0
        %1032 = vmatprep.subr.mxu0 0.0
        %1033 = vmatpush1.msra.mxu0 0.0
        %1034 = vmatprep.subr.mxu0 0.0
        %1035 = vmatpush1.msra.mxu0 0.0
        %1036 = vmatprep.subr.mxu0 0.0
        %1037 = vmatpush1.msra.mxu0 0.0
        %1038 = vmatprep.subr.mxu0 0.0
        %1039 = vmatpush1.msra.mxu0 0.0
        %1040 = vmatprep.subr.mxu0 0.0
        %1041 = vmatpush1.msra.mxu0 0.0
        %1042 = vmatprep.subr.mxu0 0.0
        %1043 = vmatpush1.msra.mxu0 0.0
        %1044 = vmatprep.subr.mxu0 0.0
        %1045 = vmatpush1.msra.mxu0 0.0
        %1046 = vmatprep.subr.mxu0 0.0
        %1047 = vmatpush1.msra.mxu0 0.0
        %1048 = vmatprep.subr.mxu0 0.0
        %1049 = vmatpush1.msra.mxu0 0.0
        %1050 = vmatprep.subr.mxu0 0.0
        %1051 = vmatpush1.msra.mxu0 0.0
        %1052 = vmatprep.subr.mxu0 0.0
        %1053 = vmatpush1.msra.mxu0 0.0
        %1054 = vmatprep.subr.mxu0 0.0
        %1055 = vmatpush1.msra.mxu0 0.0
        %1056 = vmatprep.subr.mxu0 0.0
        %1057 = vmatpush1.msra.mxu0 0.0
        %1058 = vmatprep.subr.mxu0 0.0
        %1059 = vmatpush1.msra.mxu0 0.0
        %1060 = vmatprep.subr.mxu0 0.0
        %1061 = vmatpush1.msra.mxu0 0.0
        %1062 = vmatprep.subr.mxu0 0.0
        %1063 = vmatpush1.msra.mxu0 0.0
        %1064 = vmatprep.subr.mxu0 0.0
        %1065 = vmatpush1.msra.mxu0 0.0
        %1066 = vmatprep.subr.mxu0 0.0
        %1067 = vmatpush1.msra.mxu0 0.0
        %1068 = vmatprep.subr.mxu0 0.0
        %1069 = vmatpush1.msra.mxu0 0.0
        %1070 = vmatprep.subr.mxu0 0.0
        %1071 = vmatpush1.msra.mxu0 0.0
        %1072 = vmatprep.subr.mxu0 0.0
        %1073 = vmatpush1.msra.mxu0 0.0
        %1074 = vmatprep.subr.mxu0 0.0
        %1075 = vmatpush1.msra.mxu0 0.0
        %1076 = vmatprep.subr.mxu0 0.0
        %1077 = vmatpush1.msra.mxu0 0.0
        %1078 = vmatprep.subr.mxu0 0.0
        %1079 = vmatpush1.msra.mxu0 0.0
        %1080 = vmatprep.subr.mxu0 0.0
        %1081 = vmatpush1.msra.mxu0 0.0
        %1082 = vmatprep.subr.mxu0 0.0
        %1083 = vmatpush1.msra.mxu0 0.0
        %1084 = vmatprep.subr.mxu0 0.0
        %1085 = vmatpush1.msra.mxu0 0.0
        %1086 = vmatprep.mubr.f32.mxu0 0.0
        %1087 = vmatmul.mubr.f32.gmra.mrb[0].mxu0 %v996
        %v1088 = vpop.f32.mrb[0].mxu0
        %v1089 = vadd.f32 0.0, %v1088
        %v1090 = vpop.f32.mrb[0].mxu0
        %1091 = vmatprep.mubr.f32.mxu0 0.0
        %1092 = vmatmul.mubr.f32.gmra.mrb[0].mxu0 %v999
        %v1093 = vpop.f32.mrb[0].mxu0
        %v1094 = vadd.f32 0.0, %v1093
        %v1095 = vpop.f32.mrb[0].mxu0
        %1096 = vmatprep.mubr.f32.mxu0 0.0
        %1097 = vmatmul.mubr.f32.gmra.mrb[0].mxu0 %v1002
        %v1098 = vpop.f32.mrb[0].mxu0
        %v1099 = vadd.f32 0.0, %v1098
        %v1100 = vpop.f32.mrb[0].mxu0
        %1101 = vmatprep.mubr.f32.mxu0 0.0
        %1102 = vmatmul.mubr.f32.gmra.mrb[0].mxu0 %v1005
        %v1103 = vpop.f32.mrb[0].mxu0
        %v1104 = vadd.f32 0.0, %v1103
        %v1105 = vpop.f32.mrb[0].mxu0
        %1106 = vmatprep.mubr.f32.mxu0 0.0
        %1107 = vmatmul.mubr.f32.gmra.mrb[0].mxu0 %v1008
        %v1108 = vpop.f32.mrb[0].mxu0
        %v1109 = vadd.f32 0.0, %v1108
        %v1110 = vpop.f32.mrb[0].mxu0
        %1111 = vmatprep.mubr.f32.mxu0 0.0
        %1112 = vmatmul.mubr.f32.gmra.mrb[0].mxu0 %v1011
        %v1113 = vpop.f32.mrb[0].mxu0
        %v1114 = vadd.f32 0.0, %v1113
        %v1115 = vpop.f32.mrb[0].mxu0
        %1116 = vmatprep.mubr.f32.mxu0 0.0
        %1117 = vmatmul.mubr.f32.gmra.mrb[0].mxu0 %v1014
        %v1118 = vpop.f32.mrb[0].mxu0
        %v1119 = vadd.f32 0.0, %v1118
        %v1120 = vpop.f32.mrb[0].mxu0
        %1121 = vmatprep.mubr.f32.mxu0 0.0
        %1122 = vmatmul.mubr.f32.gmra.mrb[0].mxu0 %v1017
        %v1123 = vpop.f32.mrb[0].mxu0
        %v1124 = vadd.f32 0.0, %v1123
        %v1125 = vpop.f32.mrb[0].mxu0
        %1126 = vdwg.mxu0
        %v1127 = vadd.f32 %v975, %v1089
        %v1128 = vadd.f32 %v976, %v1094
        %v1129 = vadd.f32 %v977, %v1099
        %v1130 = vadd.f32 %v978, %v1104
        %v1131 = vadd.f32 %v979, %v1109
        %v1132 = vadd.f32 %v980, %v1114
        %v1133 = vadd.f32 %v981, %v1119
        %v1134 = vadd.f32 %v982, %v1124
        %s1135 = sadd.s32 %s544, 432
        %s1136 = scalar_lea.vmem %s507, %s1135 [#allocation2]
        %v1137 = vld [vmem:[%s1136] sm:$0xff]
        %v1138 = vld [vmem:[%s1136 + $0x10] sm:$0xff]
        %v1139 = vld [vmem:[%s1136 + $0x20] sm:$0xff]
        %v1140 = vld [vmem:[%s1136 + $0x30] sm:$0xff]
        %v1141 = vld [vmem:[%s1136 + $0x40] sm:$0xff]
        %v1142 = vld [vmem:[%s1136 + $0x50] sm:$0xff]
        %v1143 = vld [vmem:[%s1136 + $0x60] sm:$0xff]
        %v1144 = vld [vmem:[%s1136 + $0x70] sm:$0xff]
        %s1145 = scalar_lea.vmem %s538, 16
        %v1146 = vld [vmem:[%s1145] sm:$0xf]
        %v1148 = vsel %vm567, %v1137, 0
        %v1151 = vsel %vm567, %v1138, 0
        %v1154 = vsel %vm567, %v1139, 0
        %v1157 = vsel %vm567, %v1140, 0
        %v1160 = vsel %vm567, %v1141, 0
        %v1163 = vsel %vm567, %v1142, 0
        %v1166 = vsel %vm567, %v1143, 0
        %v1169 = vsel %vm567, %v1144, 0
        %v1172 = vsel %vm592, %v1146, 0
        %1174 = vmatprep.subr.mxu0 0.0
        %1175 = vmatpush1.msra.mxu0 %v1172
        %1176 = vmatprep.subr.mxu0 0.0
        %1177 = vmatpush1.msra.mxu0 0.0
        %1178 = vmatprep.subr.mxu0 0.0
        %1179 = vmatpush1.msra.mxu0 0.0
        %1180 = vmatprep.subr.mxu0 0.0
        %1181 = vmatpush1.msra.mxu0 0.0
        %1182 = vmatprep.subr.mxu0 0.0
        %1183 = vmatpush1.msra.mxu0 0.0
        %1184 = vmatprep.subr.mxu0 0.0
        %1185 = vmatpush1.msra.mxu0 0.0
        %1186 = vmatprep.subr.mxu0 0.0
        %1187 = vmatpush1.msra.mxu0 0.0
        %1188 = vmatprep.subr.mxu0 0.0
        %1189 = vmatpush1.msra.mxu0 0.0
        %1190 = vmatprep.subr.mxu0 0.0
        %1191 = vmatpush1.msra.mxu0 0.0
        %1192 = vmatprep.subr.mxu0 0.0
        %1193 = vmatpush1.msra.mxu0 0.0
        %1194 = vmatprep.subr.mxu0 0.0
        %1195 = vmatpush1.msra.mxu0 0.0
        %1196 = vmatprep.subr.mxu0 0.0
        %1197 = vmatpush1.msra.mxu0 0.0
        %1198 = vmatprep.subr.mxu0 0.0
        %1199 = vmatpush1.msra.mxu0 0.0
        %1200 = vmatprep.subr.mxu0 0.0
        %1201 = vmatpush1.msra.mxu0 0.0
        %1202 = vmatprep.subr.mxu0 0.0
        %1203 = vmatpush1.msra.mxu0 0.0
        %1204 = vmatprep.subr.mxu0 0.0
        %1205 = vmatpush1.msra.mxu0 0.0
        %1206 = vmatprep.subr.mxu0 0.0
        %1207 = vmatpush1.msra.mxu0 0.0
        %1208 = vmatprep.subr.mxu0 0.0
        %1209 = vmatpush1.msra.mxu0 0.0
        %1210 = vmatprep.subr.mxu0 0.0
        %1211 = vmatpush1.msra.mxu0 0.0
        %1212 = vmatprep.subr.mxu0 0.0
        %1213 = vmatpush1.msra.mxu0 0.0
        %1214 = vmatprep.subr.mxu0 0.0
        %1215 = vmatpush1.msra.mxu0 0.0
        %1216 = vmatprep.subr.mxu0 0.0
        %1217 = vmatpush1.msra.mxu0 0.0
        %1218 = vmatprep.subr.mxu0 0.0
        %1219 = vmatpush1.msra.mxu0 0.0
        %1220 = vmatprep.subr.mxu0 0.0
        %1221 = vmatpush1.msra.mxu0 0.0
        %1222 = vmatprep.subr.mxu0 0.0
        %1223 = vmatpush1.msra.mxu0 0.0
        %1224 = vmatprep.subr.mxu0 0.0
        %1225 = vmatpush1.msra.mxu0 0.0
        %1226 = vmatprep.subr.mxu0 0.0
        %1227 = vmatpush1.msra.mxu0 0.0
        %1228 = vmatprep.subr.mxu0 0.0
        %1229 = vmatpush1.msra.mxu0 0.0
        %1230 = vmatprep.subr.mxu0 0.0
        %1231 = vmatpush1.msra.mxu0 0.0
        %1232 = vmatprep.subr.mxu0 0.0
        %1233 = vmatpush1.msra.mxu0 0.0
        %1234 = vmatprep.subr.mxu0 0.0
        %1235 = vmatpush1.msra.mxu0 0.0
        %1236 = vmatprep.subr.mxu0 0.0
        %1237 = vmatpush1.msra.mxu0 0.0
        %1238 = vmatprep.mubr.f32.mxu0 0.0
        %1239 = vmatmul.mubr.f32.gmra.mrb[0].mxu0 %v1148
        %v1240 = vpop.f32.mrb[0].mxu0
        %v1241 = vadd.f32 0.0, %v1240
        %v1242 = vpop.f32.mrb[0].mxu0
        %1243 = vmatprep.mubr.f32.mxu0 0.0
        %1244 = vmatmul.mubr.f32.gmra.mrb[0].mxu0 %v1151
        %v1245 = vpop.f32.mrb[0].mxu0
        %v1246 = vadd.f32 0.0, %v1245
        %v1247 = vpop.f32.mrb[0].mxu0
        %1248 = vmatprep.mubr.f32.mxu0 0.0
        %1249 = vmatmul.mubr.f32.gmra.mrb[0].mxu0 %v1154
        %v1250 = vpop.f32.mrb[0].mxu0
        %v1251 = vadd.f32 0.0, %v1250
        %v1252 = vpop.f32.mrb[0].mxu0
        %1253 = vmatprep.mubr.f32.mxu0 0.0
        %1254 = vmatmul.mubr.f32.gmra.mrb[0].mxu0 %v1157
        %v1255 = vpop.f32.mrb[0].mxu0
        %v1256 = vadd.f32 0.0, %v1255
        %v1257 = vpop.f32.mrb[0].mxu0
        %1258 = vmatprep.mubr.f32.mxu0 0.0
        %1259 = vmatmul.mubr.f32.gmra.mrb[0].mxu0 %v1160
        %v1260 = vpop.f32.mrb[0].mxu0
        %v1261 = vadd.f32 0.0, %v1260
        %v1262 = vpop.f32.mrb[0].mxu0
        %1263 = vmatprep.mubr.f32.mxu0 0.0
        %1264 = vmatmul.mubr.f32.gmra.mrb[0].mxu0 %v1163
        %v1265 = vpop.f32.mrb[0].mxu0
        %v1266 = vadd.f32 0.0, %v1265
        %v1267 = vpop.f32.mrb[0].mxu0
        %1268 = vmatprep.mubr.f32.mxu0 0.0
        %1269 = vmatmul.mubr.f32.gmra.mrb[0].mxu0 %v1166
        %v1270 = vpop.f32.mrb[0].mxu0
        %v1271 = vadd.f32 0.0, %v1270
        %v1272 = vpop.f32.mrb[0].mxu0
        %1273 = vmatprep.mubr.f32.mxu0 0.0
        %1274 = vmatmul.mubr.f32.gmra.mrb[0].mxu0 %v1169
        %v1275 = vpop.f32.mrb[0].mxu0
        %v1276 = vadd.f32 0.0, %v1275
        %v1277 = vpop.f32.mrb[0].mxu0
        %1278 = vdwg.mxu0
        %v1279 = vadd.f32 %v1127, %v1241
        %v1280 = vadd.f32 %v1128, %v1246
        %v1281 = vadd.f32 %v1129, %v1251
        %v1282 = vadd.f32 %v1130, %v1256
        %v1283 = vadd.f32 %v1131, %v1261
        %v1284 = vadd.f32 %v1132, %v1266
        %v1285 = vadd.f32 %v1133, %v1271
        %v1286 = vadd.f32 %v1134, %v1276
        %v1287 = vld [vmem:[%s984 + $0x1] sm:$0xff]
        %v1288 = vld [vmem:[%s984 + $0x11] sm:$0xff]
        %v1289 = vld [vmem:[%s984 + $0x21] sm:$0xff]
        %v1290 = vld [vmem:[%s984 + $0x31] sm:$0xff]
        %v1291 = vld [vmem:[%s984 + $0x41] sm:$0xff]
        %v1292 = vld [vmem:[%s984 + $0x51] sm:$0xff]
        %v1293 = vld [vmem:[%s984 + $0x61] sm:$0xff]
        %v1294 = vld [vmem:[%s984 + $0x71] sm:$0xff]
        %s1295 = scalar_lea.vmem %s538, 20
        %v1296 = vld [vmem:[%s1295] sm:$0xf]
        %v1298 = vsel %vm567, %v1287, 0
        %v1301 = vsel %vm567, %v1288, 0
        %v1304 = vsel %vm567, %v1289, 0
        %v1307 = vsel %vm567, %v1290, 0
        %v1310 = vsel %vm567, %v1291, 0
        %v1313 = vsel %vm567, %v1292, 0
        %v1316 = vsel %vm567, %v1293, 0
        %v1319 = vsel %vm567, %v1294, 0
        %v1322 = vsel %vm592, %v1296, 0
        %1324 = vmatprep.subr.mxu0 0.0
        %1325 = vmatpush1.msra.mxu0 %v1322
        %1326 = vmatprep.subr.mxu0 0.0
        %1327 = vmatpush1.msra.mxu0 0.0
        %1328 = vmatprep.subr.mxu0 0.0
        %1329 = vmatpush1.msra.mxu0 0.0
        %1330 = vmatprep.subr.mxu0 0.0
        %1331 = vmatpush1.msra.mxu0 0.0
        %1332 = vmatprep.subr.mxu0 0.0
        %1333 = vmatpush1.msra.mxu0 0.0
        %1334 = vmatprep.subr.mxu0 0.0
        %1335 = vmatpush1.msra.mxu0 0.0
        %1336 = vmatprep.subr.mxu0 0.0
        %1337 = vmatpush1.msra.mxu0 0.0
        %1338 = vmatprep.subr.mxu0 0.0
        %1339 = vmatpush1.msra.mxu0 0.0
        %1340 = vmatprep.subr.mxu0 0.0
        %1341 = vmatpush1.msra.mxu0 0.0
        %1342 = vmatprep.subr.mxu0 0.0
        %1343 = vmatpush1.msra.mxu0 0.0
        %1344 = vmatprep.subr.mxu0 0.0
        %1345 = vmatpush1.msra.mxu0 0.0
        %1346 = vmatprep.subr.mxu0 0.0
        %1347 = vmatpush1.msra.mxu0 0.0
        %1348 = vmatprep.subr.mxu0 0.0
        %1349 = vmatpush1.msra.mxu0 0.0
        %1350 = vmatprep.subr.mxu0 0.0
        %1351 = vmatpush1.msra.mxu0 0.0
        %1352 = vmatprep.subr.mxu0 0.0
        %1353 = vmatpush1.msra.mxu0 0.0
        %1354 = vmatprep.subr.mxu0 0.0
        %1355 = vmatpush1.msra.mxu0 0.0
        %1356 = vmatprep.subr.mxu0 0.0
        %1357 = vmatpush1.msra.mxu0 0.0
        %1358 = vmatprep.subr.mxu0 0.0
        %1359 = vmatpush1.msra.mxu0 0.0
        %1360 = vmatprep.subr.mxu0 0.0
        %1361 = vmatpush1.msra.mxu0 0.0
        %1362 = vmatprep.subr.mxu0 0.0
        %1363 = vmatpush1.msra.mxu0 0.0
        %1364 = vmatprep.subr.mxu0 0.0
        %1365 = vmatpush1.msra.mxu0 0.0
        %1366 = vmatprep.subr.mxu0 0.0
        %1367 = vmatpush1.msra.mxu0 0.0
        %1368 = vmatprep.subr.mxu0 0.0
        %1369 = vmatpush1.msra.mxu0 0.0
        %1370 = vmatprep.subr.mxu0 0.0
        %1371 = vmatpush1.msra.mxu0 0.0
        %1372 = vmatprep.subr.mxu0 0.0
        %1373 = vmatpush1.msra.mxu0 0.0
        %1374 = vmatprep.subr.mxu0 0.0
        %1375 = vmatpush1.msra.mxu0 0.0
        %1376 = vmatprep.subr.mxu0 0.0
        %1377 = vmatpush1.msra.mxu0 0.0
        %1378 = vmatprep.subr.mxu0 0.0
        %1379 = vmatpush1.msra.mxu0 0.0
        %1380 = vmatprep.subr.mxu0 0.0
        %1381 = vmatpush1.msra.mxu0 0.0
        %1382 = vmatprep.subr.mxu0 0.0
        %1383 = vmatpush1.msra.mxu0 0.0
        %1384 = vmatprep.subr.mxu0 0.0
        %1385 = vmatpush1.msra.mxu0 0.0
        %1386 = vmatprep.subr.mxu0 0.0
        %1387 = vmatpush1.msra.mxu0 0.0
        %1388 = vmatprep.mubr.f32.mxu0 0.0
        %1389 = vmatmul.mubr.f32.gmra.mrb[0].mxu0 %v1298
        %v1390 = vpop.f32.mrb[0].mxu0
        %v1391 = vadd.f32 0.0, %v1390
        %v1392 = vpop.f32.mrb[0].mxu0
        %1393 = vmatprep.mubr.f32.mxu0 0.0
        %1394 = vmatmul.mubr.f32.gmra.mrb[0].mxu0 %v1301
        %v1395 = vpop.f32.mrb[0].mxu0
        %v1396 = vadd.f32 0.0, %v1395
        %v1397 = vpop.f32.mrb[0].mxu0
        %1398 = vmatprep.mubr.f32.mxu0 0.0
        %1399 = vmatmul.mubr.f32.gmra.mrb[0].mxu0 %v1304
        %v1400 = vpop.f32.mrb[0].mxu0
        %v1401 = vadd.f32 0.0, %v1400
        %v1402 = vpop.f32.mrb[0].mxu0
        %1403 = vmatprep.mubr.f32.mxu0 0.0
        %1404 = vmatmul.mubr.f32.gmra.mrb[0].mxu0 %v1307
        %v1405 = vpop.f32.mrb[0].mxu0
        %v1406 = vadd.f32 0.0, %v1405
        %v1407 = vpop.f32.mrb[0].mxu0
        %1408 = vmatprep.mubr.f32.mxu0 0.0
        %1409 = vmatmul.mubr.f32.gmra.mrb[0].mxu0 %v1310
        %v1410 = vpop.f32.mrb[0].mxu0
        %v1411 = vadd.f32 0.0, %v1410
        %v1412 = vpop.f32.mrb[0].mxu0
        %1413 = vmatprep.mubr.f32.mxu0 0.0
        %1414 = vmatmul.mubr.f32.gmra.mrb[0].mxu0 %v1313
        %v1415 = vpop.f32.mrb[0].mxu0
        %v1416 = vadd.f32 0.0, %v1415
        %v1417 = vpop.f32.mrb[0].mxu0
        %1418 = vmatprep.mubr.f32.mxu0 0.0
        %1419 = vmatmul.mubr.f32.gmra.mrb[0].mxu0 %v1316
        %v1420 = vpop.f32.mrb[0].mxu0
        %v1421 = vadd.f32 0.0, %v1420
        %v1422 = vpop.f32.mrb[0].mxu0
        %1423 = vmatprep.mubr.f32.mxu0 0.0
        %1424 = vmatmul.mubr.f32.gmra.mrb[0].mxu0 %v1319
        %v1425 = vpop.f32.mrb[0].mxu0
        %v1426 = vadd.f32 0.0, %v1425
        %v1427 = vpop.f32.mrb[0].mxu0
        %1428 = vdwg.mxu0
        %v1429 = vadd.f32 %v1279, %v1391
        %v1430 = vadd.f32 %v1280, %v1396
        %v1431 = vadd.f32 %v1281, %v1401
        %v1432 = vadd.f32 %v1282, %v1406
        %v1433 = vadd.f32 %v1283, %v1411
        %v1434 = vadd.f32 %v1284, %v1416
        %v1435 = vadd.f32 %v1285, %v1421
        %v1436 = vadd.f32 %v1286, %v1426
        %s1437 = sadd.s32 %s543, 1
        %s1438 = smul.u32 %s1437, 16
        %s1439 = scalar_lea.vmem %s507, %s1438 [#allocation2]
        %v1440 = vld [vmem:[%s1439] sm:$0xff]
        %v1441 = vld [vmem:[%s1439 + $0x10] sm:$0xff]
        %v1442 = vld [vmem:[%s1439 + $0x20] sm:$0xff]
        %v1443 = vld [vmem:[%s1439 + $0x30] sm:$0xff]
        %v1444 = vld [vmem:[%s1439 + $0x40] sm:$0xff]
        %v1445 = vld [vmem:[%s1439 + $0x50] sm:$0xff]
        %v1446 = vld [vmem:[%s1439 + $0x60] sm:$0xff]
        %v1447 = vld [vmem:[%s1439 + $0x70] sm:$0xff]
        %s1448 = scalar_lea.vmem %s538, 24
        %v1449 = vld [vmem:[%s1448] sm:$0xf]
        %v1451 = vsel %vm567, %v1440, 0
        %v1454 = vsel %vm567, %v1441, 0
        %v1457 = vsel %vm567, %v1442, 0
        %v1460 = vsel %vm567, %v1443, 0
        %v1463 = vsel %vm567, %v1444, 0
        %v1466 = vsel %vm567, %v1445, 0
        %v1469 = vsel %vm567, %v1446, 0
        %v1472 = vsel %vm567, %v1447, 0
        %v1475 = vsel %vm592, %v1449, 0
        %1477 = vmatprep.subr.mxu0 0.0
        %1478 = vmatpush1.msra.mxu0 %v1475
        %1479 = vmatprep.subr.mxu0 0.0
        %1480 = vmatpush1.msra.mxu0 0.0
        %1481 = vmatprep.subr.mxu0 0.0
        %1482 = vmatpush1.msra.mxu0 0.0
        %1483 = vmatprep.subr.mxu0 0.0
        %1484 = vmatpush1.msra.mxu0 0.0
        %1485 = vmatprep.subr.mxu0 0.0
        %1486 = vmatpush1.msra.mxu0 0.0
        %1487 = vmatprep.subr.mxu0 0.0
        %1488 = vmatpush1.msra.mxu0 0.0
        %1489 = vmatprep.subr.mxu0 0.0
        %1490 = vmatpush1.msra.mxu0 0.0
        %1491 = vmatprep.subr.mxu0 0.0
        %1492 = vmatpush1.msra.mxu0 0.0
        %1493 = vmatprep.subr.mxu0 0.0
        %1494 = vmatpush1.msra.mxu0 0.0
        %1495 = vmatprep.subr.mxu0 0.0
        %1496 = vmatpush1.msra.mxu0 0.0
        %1497 = vmatprep.subr.mxu0 0.0
        %1498 = vmatpush1.msra.mxu0 0.0
        %1499 = vmatprep.subr.mxu0 0.0
        %1500 = vmatpush1.msra.mxu0 0.0
        %1501 = vmatprep.subr.mxu0 0.0
        %1502 = vmatpush1.msra.mxu0 0.0
        %1503 = vmatprep.subr.mxu0 0.0
        %1504 = vmatpush1.msra.mxu0 0.0
        %1505 = vmatprep.subr.mxu0 0.0
        %1506 = vmatpush1.msra.mxu0 0.0
        %1507 = vmatprep.subr.mxu0 0.0
        %1508 = vmatpush1.msra.mxu0 0.0
        %1509 = vmatprep.subr.mxu0 0.0
        %1510 = vmatpush1.msra.mxu0 0.0
        %1511 = vmatprep.subr.mxu0 0.0
        %1512 = vmatpush1.msra.mxu0 0.0
        %1513 = vmatprep.subr.mxu0 0.0
        %1514 = vmatpush1.msra.mxu0 0.0
        %1515 = vmatprep.subr.mxu0 0.0
        %1516 = vmatpush1.msra.mxu0 0.0
        %1517 = vmatprep.subr.mxu0 0.0
        %1518 = vmatpush1.msra.mxu0 0.0
        %1519 = vmatprep.subr.mxu0 0.0
        %1520 = vmatpush1.msra.mxu0 0.0
        %1521 = vmatprep.subr.mxu0 0.0
        %1522 = vmatpush1.msra.mxu0 0.0
        %1523 = vmatprep.subr.mxu0 0.0
        %1524 = vmatpush1.msra.mxu0 0.0
        %1525 = vmatprep.subr.mxu0 0.0
        %1526 = vmatpush1.msra.mxu0 0.0
        %1527 = vmatprep.subr.mxu0 0.0
        %1528 = vmatpush1.msra.mxu0 0.0
        %1529 = vmatprep.subr.mxu0 0.0
        %1530 = vmatpush1.msra.mxu0 0.0
        %1531 = vmatprep.subr.mxu0 0.0
        %1532 = vmatpush1.msra.mxu0 0.0
        %1533 = vmatprep.subr.mxu0 0.0
        %1534 = vmatpush1.msra.mxu0 0.0
        %1535 = vmatprep.subr.mxu0 0.0
        %1536 = vmatpush1.msra.mxu0 0.0
        %1537 = vmatprep.subr.mxu0 0.0
        %1538 = vmatpush1.msra.mxu0 0.0
        %1539 = vmatprep.subr.mxu0 0.0
        %1540 = vmatpush1.msra.mxu0 0.0
        %1541 = vmatprep.mubr.f32.mxu0 0.0
        %1542 = vmatmul.mubr.f32.gmra.mrb[0].mxu0 %v1451
        %v1543 = vpop.f32.mrb[0].mxu0
        %v1544 = vadd.f32 0.0, %v1543
        %v1545 = vpop.f32.mrb[0].mxu0
        %1546 = vmatprep.mubr.f32.mxu0 0.0
        %1547 = vmatmul.mubr.f32.gmra.mrb[0].mxu0 %v1454
        %v1548 = vpop.f32.mrb[0].mxu0
        %v1549 = vadd.f32 0.0, %v1548
        %v1550 = vpop.f32.mrb[0].mxu0
        %1551 = vmatprep.mubr.f32.mxu0 0.0
        %1552 = vmatmul.mubr.f32.gmra.mrb[0].mxu0 %v1457
        %v1553 = vpop.f32.mrb[0].mxu0
        %v1554 = vadd.f32 0.0, %v1553
        %v1555 = vpop.f32.mrb[0].mxu0
        %1556 = vmatprep.mubr.f32.mxu0 0.0
        %1557 = vmatmul.mubr.f32.gmra.mrb[0].mxu0 %v1460
        %v1558 = vpop.f32.mrb[0].mxu0
        %v1559 = vadd.f32 0.0, %v1558
        %v1560 = vpop.f32.mrb[0].mxu0
        %1561 = vmatprep.mubr.f32.mxu0 0.0
        %1562 = vmatmul.mubr.f32.gmra.mrb[0].mxu0 %v1463
        %v1563 = vpop.f32.mrb[0].mxu0
        %v1564 = vadd.f32 0.0, %v1563
        %v1565 = vpop.f32.mrb[0].mxu0
        %1566 = vmatprep.mubr.f32.mxu0 0.0
        %1567 = vmatmul.mubr.f32.gmra.mrb[0].mxu0 %v1466
        %v1568 = vpop.f32.mrb[0].mxu0
        %v1569 = vadd.f32 0.0, %v1568
        %v1570 = vpop.f32.mrb[0].mxu0
        %1571 = vmatprep.mubr.f32.mxu0 0.0
        %1572 = vmatmul.mubr.f32.gmra.mrb[0].mxu0 %v1469
        %v1573 = vpop.f32.mrb[0].mxu0
        %v1574 = vadd.f32 0.0, %v1573
        %v1575 = vpop.f32.mrb[0].mxu0
        %1576 = vmatprep.mubr.f32.mxu0 0.0
        %1577 = vmatmul.mubr.f32.gmra.mrb[0].mxu0 %v1472
        %v1578 = vpop.f32.mrb[0].mxu0
        %v1579 = vadd.f32 0.0, %v1578
        %v1580 = vpop.f32.mrb[0].mxu0
        %1581 = vdwg.mxu0
        %v1582 = vadd.f32 %v1429, %v1544
        %v1583 = vadd.f32 %v1430, %v1549
        %v1584 = vadd.f32 %v1431, %v1554
        %v1585 = vadd.f32 %v1432, %v1559
        %v1586 = vadd.f32 %v1433, %v1564
        %v1587 = vadd.f32 %v1434, %v1569
        %v1588 = vadd.f32 %v1435, %v1574
        %v1589 = vadd.f32 %v1436, %v1579
        %s1590 = sadd.s32 %s1438, 144
        %s1591 = scalar_lea.vmem %s507, %s1590 [#allocation2]
        %v1592 = vld [vmem:[%s1591] sm:$0xff]
        %v1593 = vld [vmem:[%s1591 + $0x10] sm:$0xff]
        %v1594 = vld [vmem:[%s1591 + $0x20] sm:$0xff]
        %v1595 = vld [vmem:[%s1591 + $0x30] sm:$0xff]
        %v1596 = vld [vmem:[%s1591 + $0x40] sm:$0xff]
        %v1597 = vld [vmem:[%s1591 + $0x50] sm:$0xff]
        %v1598 = vld [vmem:[%s1591 + $0x60] sm:$0xff]
        %v1599 = vld [vmem:[%s1591 + $0x70] sm:$0xff]
        %s1600 = scalar_lea.vmem %s538, 28
        %v1601 = vld [vmem:[%s1600] sm:$0xf]
        %v1603 = vsel %vm567, %v1592, 0
        %v1606 = vsel %vm567, %v1593, 0
        %v1609 = vsel %vm567, %v1594, 0
        %v1612 = vsel %vm567, %v1595, 0
        %v1615 = vsel %vm567, %v1596, 0
        %v1618 = vsel %vm567, %v1597, 0
        %v1621 = vsel %vm567, %v1598, 0
        %v1624 = vsel %vm567, %v1599, 0
        %v1627 = vsel %vm592, %v1601, 0
        %1629 = vmatprep.subr.mxu0 0.0
        %1630 = vmatpush1.msra.mxu0 %v1627
        %1631 = vmatprep.subr.mxu0 0.0
        %1632 = vmatpush1.msra.mxu0 0.0
        %1633 = vmatprep.subr.mxu0 0.0
        %1634 = vmatpush1.msra.mxu0 0.0
        %1635 = vmatprep.subr.mxu0 0.0
        %1636 = vmatpush1.msra.mxu0 0.0
        %1637 = vmatprep.subr.mxu0 0.0
        %1638 = vmatpush1.msra.mxu0 0.0
        %1639 = vmatprep.subr.mxu0 0.0
        %1640 = vmatpush1.msra.mxu0 0.0
        %1641 = vmatprep.subr.mxu0 0.0
        %1642 = vmatpush1.msra.mxu0 0.0
        %1643 = vmatprep.subr.mxu0 0.0
        %1644 = vmatpush1.msra.mxu0 0.0
        %1645 = vmatprep.subr.mxu0 0.0
        %1646 = vmatpush1.msra.mxu0 0.0
        %1647 = vmatprep.subr.mxu0 0.0
        %1648 = vmatpush1.msra.mxu0 0.0
        %1649 = vmatprep.subr.mxu0 0.0
        %1650 = vmatpush1.msra.mxu0 0.0
        %1651 = vmatprep.subr.mxu0 0.0
        %1652 = vmatpush1.msra.mxu0 0.0
        %1653 = vmatprep.subr.mxu0 0.0
        %1654 = vmatpush1.msra.mxu0 0.0
        %1655 = vmatprep.subr.mxu0 0.0
        %1656 = vmatpush1.msra.mxu0 0.0
        %1657 = vmatprep.subr.mxu0 0.0
        %1658 = vmatpush1.msra.mxu0 0.0
        %1659 = vmatprep.subr.mxu0 0.0
        %1660 = vmatpush1.msra.mxu0 0.0
        %1661 = vmatprep.subr.mxu0 0.0
        %1662 = vmatpush1.msra.mxu0 0.0
        %1663 = vmatprep.subr.mxu0 0.0
        %1664 = vmatpush1.msra.mxu0 0.0
        %1665 = vmatprep.subr.mxu0 0.0
        %1666 = vmatpush1.msra.mxu0 0.0
        %1667 = vmatprep.subr.mxu0 0.0
        %1668 = vmatpush1.msra.mxu0 0.0
        %1669 = vmatprep.subr.mxu0 0.0
        %1670 = vmatpush1.msra.mxu0 0.0
        %1671 = vmatprep.subr.mxu0 0.0
        %1672 = vmatpush1.msra.mxu0 0.0
        %1673 = vmatprep.subr.mxu0 0.0
        %1674 = vmatpush1.msra.mxu0 0.0
        %1675 = vmatprep.subr.mxu0 0.0
        %1676 = vmatpush1.msra.mxu0 0.0
        %1677 = vmatprep.subr.mxu0 0.0
        %1678 = vmatpush1.msra.mxu0 0.0
        %1679 = vmatprep.subr.mxu0 0.0
        %1680 = vmatpush1.msra.mxu0 0.0
        %1681 = vmatprep.subr.mxu0 0.0
        %1682 = vmatpush1.msra.mxu0 0.0
        %1683 = vmatprep.subr.mxu0 0.0
        %1684 = vmatpush1.msra.mxu0 0.0
        %1685 = vmatprep.subr.mxu0 0.0
        %1686 = vmatpush1.msra.mxu0 0.0
        %1687 = vmatprep.subr.mxu0 0.0
        %1688 = vmatpush1.msra.mxu0 0.0
        %1689 = vmatprep.subr.mxu0 0.0
        %1690 = vmatpush1.msra.mxu0 0.0
        %1691 = vmatprep.subr.mxu0 0.0
        %1692 = vmatpush1.msra.mxu0 0.0
        %1693 = vmatprep.mubr.f32.mxu0 0.0
        %1694 = vmatmul.mubr.f32.gmra.mrb[0].mxu0 %v1603
        %v1695 = vpop.f32.mrb[0].mxu0
        %v1696 = vadd.f32 0.0, %v1695
        %v1697 = vpop.f32.mrb[0].mxu0
        %1698 = vmatprep.mubr.f32.mxu0 0.0
        %1699 = vmatmul.mubr.f32.gmra.mrb[0].mxu0 %v1606
        %v1700 = vpop.f32.mrb[0].mxu0
        %v1701 = vadd.f32 0.0, %v1700
        %v1702 = vpop.f32.mrb[0].mxu0
        %1703 = vmatprep.mubr.f32.mxu0 0.0
        %1704 = vmatmul.mubr.f32.gmra.mrb[0].mxu0 %v1609
        %v1705 = vpop.f32.mrb[0].mxu0
        %v1706 = vadd.f32 0.0, %v1705
        %v1707 = vpop.f32.mrb[0].mxu0
        %1708 = vmatprep.mubr.f32.mxu0 0.0
        %1709 = vmatmul.mubr.f32.gmra.mrb[0].mxu0 %v1612
        %v1710 = vpop.f32.mrb[0].mxu0
        %v1711 = vadd.f32 0.0, %v1710
        %v1712 = vpop.f32.mrb[0].mxu0
        %1713 = vmatprep.mubr.f32.mxu0 0.0
        %1714 = vmatmul.mubr.f32.gmra.mrb[0].mxu0 %v1615
        %v1715 = vpop.f32.mrb[0].mxu0
        %v1716 = vadd.f32 0.0, %v1715
        %v1717 = vpop.f32.mrb[0].mxu0
        %1718 = vmatprep.mubr.f32.mxu0 0.0
        %1719 = vmatmul.mubr.f32.gmra.mrb[0].mxu0 %v1618
        %v1720 = vpop.f32.mrb[0].mxu0
        %v1721 = vadd.f32 0.0, %v1720
        %v1722 = vpop.f32.mrb[0].mxu0
        %1723 = vmatprep.mubr.f32.mxu0 0.0
        %1724 = vmatmul.mubr.f32.gmra.mrb[0].mxu0 %v1621
        %v1725 = vpop.f32.mrb[0].mxu0
        %v1726 = vadd.f32 0.0, %v1725
        %v1727 = vpop.f32.mrb[0].mxu0
        %1728 = vmatprep.mubr.f32.mxu0 0.0
        %1729 = vmatmul.mubr.f32.gmra.mrb[0].mxu0 %v1624
        %v1730 = vpop.f32.mrb[0].mxu0
        %v1731 = vadd.f32 0.0, %v1730
        %v1732 = vpop.f32.mrb[0].mxu0
        %1733 = vdwg.mxu0
        %v1734 = vadd.f32 %v1582, %v1696
        %v1735 = vadd.f32 %v1583, %v1701
        %v1736 = vadd.f32 %v1584, %v1706
        %v1737 = vadd.f32 %v1585, %v1711
        %v1738 = vadd.f32 %v1586, %v1716
        %v1739 = vadd.f32 %v1587, %v1721
        %v1740 = vadd.f32 %v1588, %v1726
        %v1741 = vadd.f32 %v1589, %v1731
        %v1742 = vld [vmem:[%s1439 + $0x1] sm:$0xff]
        %v1743 = vld [vmem:[%s1439 + $0x11] sm:$0xff]
        %v1744 = vld [vmem:[%s1439 + $0x21] sm:$0xff]
        %v1745 = vld [vmem:[%s1439 + $0x31] sm:$0xff]
        %v1746 = vld [vmem:[%s1439 + $0x41] sm:$0xff]
        %v1747 = vld [vmem:[%s1439 + $0x51] sm:$0xff]
        %v1748 = vld [vmem:[%s1439 + $0x61] sm:$0xff]
        %v1749 = vld [vmem:[%s1439 + $0x71] sm:$0xff]
        %s1750 = scalar_lea.vmem %s538, 32
        %v1751 = vld [vmem:[%s1750] sm:$0xf]
        %v1753 = vsel %vm567, %v1742, 0
        %v1756 = vsel %vm567, %v1743, 0
        %v1759 = vsel %vm567, %v1744, 0
        %v1762 = vsel %vm567, %v1745, 0
        %v1765 = vsel %vm567, %v1746, 0
        %v1768 = vsel %vm567, %v1747, 0
        %v1771 = vsel %vm567, %v1748, 0
        %v1774 = vsel %vm567, %v1749, 0
        %v1777 = vsel %vm592, %v1751, 0
        %1779 = vmatprep.subr.mxu0 0.0
        %1780 = vmatpush1.msra.mxu0 %v1777
        %1781 = vmatprep.subr.mxu0 0.0
        %1782 = vmatpush1.msra.mxu0 0.0
        %1783 = vmatprep.subr.mxu0 0.0
        %1784 = vmatpush1.msra.mxu0 0.0
        %1785 = vmatprep.subr.mxu0 0.0
        %1786 = vmatpush1.msra.mxu0 0.0
        %1787 = vmatprep.subr.mxu0 0.0
        %1788 = vmatpush1.msra.mxu0 0.0
        %1789 = vmatprep.subr.mxu0 0.0
        %1790 = vmatpush1.msra.mxu0 0.0
        %1791 = vmatprep.subr.mxu0 0.0
        %1792 = vmatpush1.msra.mxu0 0.0
        %1793 = vmatprep.subr.mxu0 0.0
        %1794 = vmatpush1.msra.mxu0 0.0
        %1795 = vmatprep.subr.mxu0 0.0
        %1796 = vmatpush1.msra.mxu0 0.0
        %1797 = vmatprep.subr.mxu0 0.0
        %1798 = vmatpush1.msra.mxu0 0.0
        %1799 = vmatprep.subr.mxu0 0.0
        %1800 = vmatpush1.msra.mxu0 0.0
        %1801 = vmatprep.subr.mxu0 0.0
        %1802 = vmatpush1.msra.mxu0 0.0
        %1803 = vmatprep.subr.mxu0 0.0
        %1804 = vmatpush1.msra.mxu0 0.0
        %1805 = vmatprep.subr.mxu0 0.0
        %1806 = vmatpush1.msra.mxu0 0.0
        %1807 = vmatprep.subr.mxu0 0.0
        %1808 = vmatpush1.msra.mxu0 0.0
        %1809 = vmatprep.subr.mxu0 0.0
        %1810 = vmatpush1.msra.mxu0 0.0
        %1811 = vmatprep.subr.mxu0 0.0
        %1812 = vmatpush1.msra.mxu0 0.0
        %1813 = vmatprep.subr.mxu0 0.0
        %1814 = vmatpush1.msra.mxu0 0.0
        %1815 = vmatprep.subr.mxu0 0.0
        %1816 = vmatpush1.msra.mxu0 0.0
        %1817 = vmatprep.subr.mxu0 0.0
        %1818 = vmatpush1.msra.mxu0 0.0
        %1819 = vmatprep.subr.mxu0 0.0
        %1820 = vmatpush1.msra.mxu0 0.0
        %1821 = vmatprep.subr.mxu0 0.0
        %1822 = vmatpush1.msra.mxu0 0.0
        %1823 = vmatprep.subr.mxu0 0.0
        %1824 = vmatpush1.msra.mxu0 0.0
        %1825 = vmatprep.subr.mxu0 0.0
        %1826 = vmatpush1.msra.mxu0 0.0
        %1827 = vmatprep.subr.mxu0 0.0
        %1828 = vmatpush1.msra.mxu0 0.0
        %1829 = vmatprep.subr.mxu0 0.0
        %1830 = vmatpush1.msra.mxu0 0.0
        %1831 = vmatprep.subr.mxu0 0.0
        %1832 = vmatpush1.msra.mxu0 0.0
        %1833 = vmatprep.subr.mxu0 0.0
        %1834 = vmatpush1.msra.mxu0 0.0
        %1835 = vmatprep.subr.mxu0 0.0
        %1836 = vmatpush1.msra.mxu0 0.0
        %1837 = vmatprep.subr.mxu0 0.0
        %1838 = vmatpush1.msra.mxu0 0.0
        %1839 = vmatprep.subr.mxu0 0.0
        %1840 = vmatpush1.msra.mxu0 0.0
        %1841 = vmatprep.subr.mxu0 0.0
        %1842 = vmatpush1.msra.mxu0 0.0
        %1843 = vmatprep.mubr.f32.mxu0 0.0
        %1844 = vmatmul.mubr.f32.gmra.mrb[0].mxu0 %v1753
        %v1845 = vpop.f32.mrb[0].mxu0
        %v1846 = vadd.f32 0.0, %v1845
        %v1847 = vpop.f32.mrb[0].mxu0
        %1848 = vmatprep.mubr.f32.mxu0 0.0
        %1849 = vmatmul.mubr.f32.gmra.mrb[0].mxu0 %v1756
        %v1850 = vpop.f32.mrb[0].mxu0
        %v1851 = vadd.f32 0.0, %v1850
        %v1852 = vpop.f32.mrb[0].mxu0
        %1853 = vmatprep.mubr.f32.mxu0 0.0
        %1854 = vmatmul.mubr.f32.gmra.mrb[0].mxu0 %v1759
        %v1855 = vpop.f32.mrb[0].mxu0
        %v1856 = vadd.f32 0.0, %v1855
        %v1857 = vpop.f32.mrb[0].mxu0
        %1858 = vmatprep.mubr.f32.mxu0 0.0
        %1859 = vmatmul.mubr.f32.gmra.mrb[0].mxu0 %v1762
        %v1860 = vpop.f32.mrb[0].mxu0
        %v1861 = vadd.f32 0.0, %v1860
        %v1862 = vpop.f32.mrb[0].mxu0
        %1863 = vmatprep.mubr.f32.mxu0 0.0
        %1864 = vmatmul.mubr.f32.gmra.mrb[0].mxu0 %v1765
        %v1865 = vpop.f32.mrb[0].mxu0
        %v1866 = vadd.f32 0.0, %v1865
        %v1867 = vpop.f32.mrb[0].mxu0
        %1868 = vmatprep.mubr.f32.mxu0 0.0
        %1869 = vmatmul.mubr.f32.gmra.mrb[0].mxu0 %v1768
        %v1870 = vpop.f32.mrb[0].mxu0
        %v1871 = vadd.f32 0.0, %v1870
        %v1872 = vpop.f32.mrb[0].mxu0
        %1873 = vmatprep.mubr.f32.mxu0 0.0
        %1874 = vmatmul.mubr.f32.gmra.mrb[0].mxu0 %v1771
        %v1875 = vpop.f32.mrb[0].mxu0
        %v1876 = vadd.f32 0.0, %v1875
        %v1877 = vpop.f32.mrb[0].mxu0
        %1878 = vmatprep.mubr.f32.mxu0 0.0
        %1879 = vmatmul.mubr.f32.gmra.mrb[0].mxu0 %v1774
        %v1880 = vpop.f32.mrb[0].mxu0
        %v1881 = vadd.f32 0.0, %v1880
        %v1882 = vpop.f32.mrb[0].mxu0
        %1883 = vdwg.mxu0
        %v1884 = vadd.f32 %v1734, %v1846
        %v1885 = vadd.f32 %v1735, %v1851
        %v1886 = vadd.f32 %v1736, %v1856
        %v1887 = vadd.f32 %v1737, %v1861
        %v1888 = vadd.f32 %v1738, %v1866
        %v1889 = vadd.f32 %v1739, %v1871
        %v1890 = vadd.f32 %v1740, %v1876
        %v1891 = vadd.f32 %v1741, %v1881
        %v1892 = vld [vmem:[%s541] sm:$0x1]
        %v1894 = vlaneseq
        %v1895 = vshrl.u32 %v1894, 7
        %v1896 = vsub.s32 0, %v1895
        %v1897 = vrot.slane %v1892, %v1896
        %v1899 = vadd.f32 %v1884, %v1897
        %v1900 = vadd.f32 %v1885, %v1897
        %v1901 = vadd.f32 %v1886, %v1897
        %v1902 = vadd.f32 %v1887, %v1897
        %v1903 = vadd.f32 %v1888, %v1897
        %v1904 = vadd.f32 %v1889, %v1897
        %v1905 = vadd.f32 %v1890, %v1897
        %v1906 = vadd.f32 %v1891, %v1897
        %1907 = vst [vmem:[%s534] sm:$0xff] %v1899
        %1908 = vst [vmem:[%s534 + $0x8] sm:$0xff] %v1900
        %1909 = vst [vmem:[%s534 + $0x10] sm:$0xff] %v1901
        %1910 = vst [vmem:[%s534 + $0x18] sm:$0xff] %v1902
        %1911 = vst [vmem:[%s534 + $0x20] sm:$0xff] %v1903
        %1912 = vst [vmem:[%s534 + $0x28] sm:$0xff] %v1904
        %1913 = vst [vmem:[%s534 + $0x30] sm:$0xff] %v1905
        %1914 = vst [vmem:[%s534 + $0x38] sm:$0xff] %v1906
        %s1915 = sand.u32 %s126, 1
        %s1916 = scalar_lea.sflag [#allocation4], %s1915
        %s1917 = sand.u32 %s126, 1
        %s1918 = smul.addr %s1917, 64
        %s1919 = scalar_lea.vmem [#allocation3], %s1918
        // Predicated region
        $region71: #{tpu_custom_call.1} parent=65 // pred_check
          %p1920 = pneg %p136
        $region72: #{tpu_custom_call.1} parent=65 // pred_check_branch
          %1922 = sbr.rel (%p1920) target = $region74
        $region73: #{tpu_custom_call.1} parent=65 // pred_region
          %s1923 = smul.u32 8, %s24
          %s1925 = ssub.s32 1024, 1024
          %1926 = vsyncadd %s1916, %s1925
          %s1927 = sadd.s32 %s23, %s1923
          %s1928 = smul.addr %s22, 8
          %s1929 = sadd.s32 %s1927, %s1928
          %s1930 = smul.addr %s1929, 128
          %s1931 = scalar_lea.hbm %s3, %s1930
          %s1932 = sshll.u32 %s1919, 4
          %s1933 = int_to_ptr.vmem [resolvable:$true] %s1932
          %1938 = dma.vmem_to_hbm [thread:$0]  %s1933, 1024, %s1931, %s1916, 128, 128, 8
        $region74: #{tpu_custom_call.1} parent=65 // pred_fallthru
          _
      $region66: #{tpu_custom_call.1} parent=5 // pred_fallthru
        _
      %p1939 = scmp.le.s32.totalorder 2, %s12
      // Predicated region
      $region75: #{tpu_custom_call.1} parent=5 // pred_check
        %p1940 = pneg %p1939
      $region76: #{tpu_custom_call.1} parent=5 // pred_check_branch
        %1942 = sbr.rel (%p1940) target = $region78
      $region77: #{tpu_custom_call.1} parent=5 // pred_region
        %s1943 = ssub.s32 %s12, 2
        // Predicated region
        $region79: #{tpu_custom_call.1} parent=77 // pred_check
          %p1944 = pneg %p142
        $region80: #{tpu_custom_call.1} parent=77 // pred_check_branch
          %1946 = sbr.rel (%p1944) target = $region82
        $region81: #{tpu_custom_call.1} parent=77 // pred_region
          %s1947 = sand.u32 %s127, 1
          %s1948 = scalar_lea.sflag [#allocation4], %s1947
          %s1949 = sand.u32 %s127, 1
          %s1950 = smul.addr %s1949, 64
          %s1951 = scalar_lea.vmem [#allocation3], %s1950
          %1952 = dma.done %s1948, 1024
        $region82: #{tpu_custom_call.1} parent=77 // pred_fallthru
          _
      $region78: #{tpu_custom_call.1} parent=5 // pred_fallthru
        _
    $region6: #{tpu_custom_call.1} parent=1 // loop_footer
      %s16 = sadd.s32 1, %s12
    $region7: #{tpu_custom_call.1} parent=1 // loop_footer_branch
      %11 = sbr.rel target = $region3
    $region8: #{tpu_custom_call.1} parent=1 // loop_exit
      _
    %1953 = vsyncpa [#allocation4], 1
    %s1954 = scalar_lea.sflag [#allocation4], 1
    %1955 = vsyncpa %s1954, 1

</llo_original>
